<compile_context>
chip_gen: v6e
topology: v6e:2x2x1
jax: 0.10.0
libtpu: 0.0.40
codegen_flags: <defaults>
</compile_context>

<pallas_src>
import functools

import jax
import jax.numpy as jnp
from jax import lax
from jax.experimental import pallas as pl
from jax.experimental.pallas import tpu as pltpu


def _rup128(c):
    return ((c + 127) // 128) * 128


# ----------------------------------------------------------------------------
# Fused kernel body (shared by the identity- and projection-shortcut variants)
# ----------------------------------------------------------------------------
def _bottleneck_body(x_ref, w1_ref, b1_ref, w2_ref, b2_ref, w3_ref, b3_ref,
                     o_ref, s_ref, *, bsc_ref=None):
    Hs, Ws, Cin_p = x_ref.shape[1], x_ref.shape[2], x_ref.shape[3]
    Cmid_p = w2_ref.shape[2]
    Cout_p = w3_ref.shape[1]
    M = Hs * Ws

    xs2d = x_ref[0].reshape(M, Cin_p)                       # bf16 (M, Cin_p)

    # --- conv1 (1x1, stride folded by caller) fused with the projection
    #     shortcut: one MXU pass over the input, split by lane slice. --------
    y1 = jnp.dot(xs2d, w1_ref[...], preferred_element_type=jnp.float32)
    h1 = jnp.maximum(y1[:, :Cmid_p] + b1_ref[...], 0.0)     # f32 (M, Cmid_p)
    if bsc_ref is not None:                                  # projection + BN
        sc = y1[:, Cmid_p:] + bsc_ref[...]
    else:                                                    # identity add
        sc = xs2d.astype(jnp.float32)

    # --- stage h1 into the width-expanded conv2 operand S (bf16) ------------
    # S[r, x, dx*C:(dx+1)*C] = h1[r-1, x-1+dx]   (zero outside the image)
    # dx shifts via XLU roll on the flat (M, C) slab; the wrapped column is
    # masked to zero.  All scratch stores are lane-aligned / full-sublane.
    zrow = jnp.zeros((Ws, 3 * Cmid_p), jnp.bfloat16)
    s_ref[0] = zrow                                          # dy = -1 border
    s_ref[Hs + 1] = zrow                                     # dy = +1 border

    xcol = lax.broadcasted_iota(jnp.int32, (Hs, Ws, Cmid_p), 1)
    r0 = pltpu.roll(h1, 1, axis=0).reshape(Hs, Ws, Cmid_p)       # h1[y, x-1]
    r2 = pltpu.roll(h1, M - 1, axis=0).reshape(Hs, Ws, Cmid_p)   # h1[y, x+1]
    s_ref[1:Hs + 1, :, 0:Cmid_p] = (
        jnp.where(xcol == 0, 0.0, r0).astype(jnp.bfloat16))
    s_ref[1:Hs + 1, :, Cmid_p:2 * Cmid_p] = (
        h1.reshape(Hs, Ws, Cmid_p).astype(jnp.bfloat16))
    s_ref[1:Hs + 1, :, 2 * Cmid_p:] = (
        jnp.where(xcol == Ws - 1, 0.0, r2).astype(jnp.bfloat16))

    # --- conv2: 3x3 as 3 stacked-K matmuls (K = 3*Cmid), one per dy row -----
    acc = jnp.dot(s_ref[0:Hs].reshape(M, 3 * Cmid_p), w2_ref[0],
                  preferred_element_type=jnp.float32)
    acc = acc + jnp.dot(s_ref[1:Hs + 1].reshape(M, 3 * Cmid_p), w2_ref[1],
                        preferred_element_type=jnp.float32)
    acc = acc + jnp.dot(s_ref[2:Hs + 2].reshape(M, 3 * Cmid_p), w2_ref[2],
                        preferred_element_type=jnp.float32)
    h2 = jnp.maximum(acc + b2_ref[...], 0.0).astype(jnp.bfloat16)

    # --- conv3 (1x1) + BN, shortcut add, final ReLU --------------------------
    left = jnp.dot(h2, w3_ref[...], preferred_element_type=jnp.float32)
    left = left + b3_ref[...]
    out = jnp.maximum(left + sc, 0.0)
    o_ref[0] = out.reshape(Hs, Ws, Cout_p).astype(o_ref.dtype)   # lane-dense


def _bottleneck_kernel_identity(x_ref, w1_ref, b1_ref, w2_ref, b2_ref,
                                w3_ref, b3_ref, o_ref, s_ref):
    _bottleneck_body(x_ref, w1_ref, b1_ref, w2_ref, b2_ref, w3_ref, b3_ref,
                     o_ref, s_ref)


def _bottleneck_kernel_proj(x_ref, w1_ref, b1_ref, w2_ref, b2_ref,
                            w3_ref, b3_ref, bsc_ref, o_ref, s_ref):
    _bottleneck_body(x_ref, w1_ref, b1_ref, w2_ref, b2_ref, w3_ref, b3_ref,
                     o_ref, s_ref, bsc_ref=bsc_ref)


# ----------------------------------------------------------------------------
# pallas_call wrapper
# ----------------------------------------------------------------------------
def _rep_spec(shape):
    """Weight/bias replicated across all grid steps (constant block index, so
    Pallas issues its DMA only once and the block stays VMEM-resident)."""
    nd = len(shape)
    return pl.BlockSpec(shape, lambda n, _nd=nd: (0,) * _nd)


def _bottleneck_pallas(xs, kp):
    N, Hs, Ws, Cin_p = xs.shape
    Cmid_p = kp["w2s"].shape[2]
    Cout_p = kp["w3"].shape[1]
    Ccat = kp["w1cat"].shape[1]
    has_proj = "bsc" in kp

    in_specs = [
        pl.BlockSpec((1, Hs, Ws, Cin_p), lambda n: (n, 0, 0, 0)),
        _rep_spec((Cin_p, Ccat)), _rep_spec((1, Cmid_p)),
        _rep_spec((3, 3 * Cmid_p, Cmid_p)), _rep_spec((1, Cmid_p)),
        _rep_spec((Cmid_p, Cout_p)), _rep_spec((1, Cout_p)),
    ]
    args = [xs, kp["w1cat"], kp["b1"], kp["w2s"], kp["b2"], kp["w3"], kp["b3"]]

    if has_proj:
        in_specs.append(_rep_spec((1, Cout_p)))
        args.append(kp["bsc"])
        kernel = _bottleneck_kernel_proj
    else:
        # Identity shortcut is a plain add: requires Cin == Cout (and the
        # caller applies no stride in that case, per the module definition).
        assert Cin_p == Cout_p and Ccat == Cmid_p, \
            "identity shortcut requires Cin == Cout"
        kernel = _bottleneck_kernel_identity

    M = Hs * Ws
    flops = 2 * N * M * (Cin_p * Ccat + 3 * (3 * Cmid_p) * Cmid_p
                         + Cmid_p * Cout_p)
    bytes_accessed = (xs.size * xs.dtype.itemsize
                      + N * M * Cout_p * 4
                      + sum(int(a.size) * a.dtype.itemsize for a in args[1:]))

    return pl.pallas_call(
        kernel,
        out_shape=jax.ShapeDtypeStruct((N, Hs, Ws, Cout_p), jnp.float32),
        grid=(N,),
        in_specs=in_specs,
        out_specs=pl.BlockSpec((1, Hs, Ws, Cout_p), lambda n: (n, 0, 0, 0)),
        scratch_shapes=[pltpu.VMEM((Hs + 2, Ws, 3 * Cmid_p), jnp.bfloat16)],
        compiler_params=pltpu.CompilerParams(
            dimension_semantics=("parallel",)),
        cost_estimate=pl.CostEstimate(
            flops=flops, transcendentals=0, bytes_accessed=bytes_accessed),
    )(*args)


# ----------------------------------------------------------------------------
# Parameter setup: deterministic init + BN folding (plain-JAX, setup time)
# ----------------------------------------------------------------------------
def _fold_bn(w_hwio, gamma, beta, mean, var, eps=1e-5):
    """Fold inference-mode BN into conv weight (HWIO) + per-channel bias."""
    scale = gamma / jnp.sqrt(var + eps)
    w_f = w_hwio * scale
    b_f = beta - mean * scale
    return w_f.astype(jnp.float32), b_f.reshape(1, -1).astype(jnp.float32)


def init_bottleneck_params(key, inchannel, outchannel, stride):
    cmid = outchannel // 4
    ks = jax.random.split(key, 16)

    def conv_w(k, shape):                                   # HWIO
        return jax.random.normal(k, shape, jnp.float32) * 0.1

    def bn(k0, k1, k2, k3, c):
        gamma = jax.random.uniform(k0, (c,), jnp.float32, 0.5, 1.5)
        beta = jax.random.normal(k1, (c,), jnp.float32) * 0.1
        mean = jax.random.normal(k2, (c,), jnp.float32) * 0.1
        var = jax.random.uniform(k3, (c,), jnp.float32, 0.5, 1.5)
        return gamma, beta, mean, var

    w1 = conv_w(ks[0], (1, 1, inchannel, cmid))
    w2 = conv_w(ks[1], (3, 3, cmid, cmid))
    w3 = conv_w(ks[2], (1, 1, cmid, outchannel))
    w1f, b1f = _fold_bn(w1, *bn(ks[3], ks[4], ks[5], ks[6], cmid))
    w2f, b2f = _fold_bn(w2, *bn(ks[7], ks[8], ks[9], ks[10], cmid))
    w3f, b3f = _fold_bn(w3, *bn(ks[11], ks[12], ks[13], ks[14], outchannel))

    params = dict(w1f=w1f.reshape(inchannel, cmid), b1f=b1f,
                  w2f=w2f, b2f=b2f,
                  w3f=w3f.reshape(cmid, outchannel), b3f=b3f)

    if stride != 1 or inchannel != outchannel:
        wsc = conv_w(ks[15], (1, 1, inchannel, outchannel))
        wscf, bscf = _fold_bn(wsc, *bn(*jax.random.split(ks[15], 4), outchannel))
        params["wscf"] = wscf.reshape(inchannel, outchannel)
        params["bscf"] = bscf
    return params


def prepare_kernel_params(params, inchannel):
    """Pad channels to 128-lane multiples, cast matmul weights to bf16,
    stack the 3x3 weight along K per dy row, fuse w1 with the projection."""
    cmid = params["w1f"].shape[1]
    cout = params["w3f"].shape[1]
    cin_p, cmid_p, cout_p = _rup128(inchannel), _rup128(cmid), _rup128(cout)

    def pad2(w, rows, cols):
        return jnp.pad(w, ((0, rows - w.shape[0]), (0, cols - w.shape[1])))

    w1 = pad2(params["w1f"], cin_p, cmid_p)
    if "wscf" in params:
        wsc = pad2(params["wscf"], cin_p, cout_p)
        w1cat = jnp.concatenate([w1, wsc], axis=1)          # (Cin_p, Cmid+Cout)
        bsc = jnp.pad(params["bscf"], ((0, 0), (0, cout_p - cout)))
    else:
        w1cat, bsc = w1, None

    # HWIO (3,3,Cmid,Cmid) -> pad channels -> (3, 3*Cmid_p, Cmid_p): row dy
    # holds the dx=0|1|2 taps stacked along K (matches the S lane blocks).
    w2 = jnp.pad(params["w2f"],
                 ((0, 0), (0, 0), (0, cmid_p - cmid), (0, cmid_p - cmid)))
    w2s = w2.reshape(3, 3 * cmid_p, cmid_p)
    w3 = pad2(params["w3f"], cmid_p, cout_p)

    kp = dict(
        w1cat=w1cat.astype(jnp.bfloat16),
        b1=jnp.pad(params["b1f"], ((0, 0), (0, cmid_p - cmid))).astype(jnp.float32),
        w2s=w2s.astype(jnp.bfloat16),
        b2=jnp.pad(params["b2f"], ((0, 0), (0, cmid_p - cmid))).astype(jnp.float32),
        w3=w3.astype(jnp.bfloat16),
        b3=jnp.pad(params["b3f"], ((0, 0), (0, cout_p - cout))).astype(jnp.float32),
    )
    if bsc is not None:
        kp["bsc"] = bsc.astype(jnp.float32)
    return kp


# ----------------------------------------------------------------------------
# Forward pass (Pallas) and pure-JAX reference
# ----------------------------------------------------------------------------
@functools.partial(jax.jit, static_argnames=("stride", "outchannel"))
def bottleneck_forward(x_nchw, kparams, stride, outchannel):
    # NCHW -> NHWC, conv1/projection 1x1 stride as a slice, bf16 cast and
    # channel zero-pad: one fused XLA pass feeding the kernel's input DMA.
    xs = jnp.transpose(x_nchw, (0, 2, 3, 1))[:, ::stride, ::stride, :]
    xs = xs.astype(jnp.bfloat16)
    cin = xs.shape[-1]
    cin_p = kparams["w1cat"].shape[0]
    if cin_p != cin:
        xs = jnp.pad(xs, ((0, 0), (0, 0), (0, 0), (0, cin_p - cin)))
    out = _bottleneck_pallas(xs, kparams)                   # (N,Hs,Ws,Cout_p) f32
    out = out[..., :outchannel]
    return jnp.transpose(out, (0, 3, 1, 2))                 # back to NCHW


def bottleneck_reference(x_nchw, params, stride):
    """Pure-JAX reference (lax.conv) with the same bf16-operand / f32-accum
    numerics and the same folded eval-mode BN parameters."""
    dn = ("NHWC", "HWIO", "NHWC")
    x = jnp.transpose(x_nchw, (0, 2, 3, 1)).astype(jnp.bfloat16)
    cin = x.shape[-1]
    cmid = params["w1f"].shape[1]
    cout = params["w3f"].shape[1]

    def conv(inp, w_hwio, strides, padding):
        return lax.conv_general_dilated(
            inp.astype(jnp.bfloat16), w_hwio.astype(jnp.bfloat16),
            strides, padding, dimension_numbers=dn,
            preferred_element_type=jnp.float32)

    h1 = conv(x, params["w1f"].reshape(1, 1, cin, cmid), (stride, stride), "VALID")
    h1 = jnp.maximum(h1 + params["b1f"].reshape(1, 1, 1, -1), 0.0)
    h2 = conv(h1, params["w2f"], (1, 1), "SAME")
    h2 = jnp.maximum(h2 + params["b2f"].reshape(1, 1, 1, -1), 0.0)
    left = conv(h2, params["w3f"].reshape(1, 1, cmid, cout), (1, 1), "VALID")
    left = left + params["b3f"].reshape(1, 1, 1, -1)
    if "wscf" in params:
        sc = conv(x, params["wscf"].reshape(1, 1, cin, cout), (stride, stride),
                  "VALID")
        sc = sc + params["bscf"].reshape(1, 1, 1, -1)
    else:
        sc = x[:, ::stride, ::stride, :].astype(jnp.float32)
    out = jnp.maximum(left + sc, 0.0)
    return jnp.transpose(out, (0, 3, 1, 2))


# ----------------------------------------------------------------------------
if __name__ == "__main__":
    key = jax.random.PRNGKey(0)
    k_x1, k_p1, k_x2, k_p2 = jax.random.split(key, 4)
    N, H, W = 2, 16, 16

    # Config 1: projection shortcut (stride=2, channel expansion 8 -> 16).
    x1 = jax.random.normal(k_x1, (N, 8, H, W), jnp.float32)        # NCHW
    p1 = init_bottleneck_params(k_p1, 8, 16, 2)
    kp1 = prepare_kernel_params(p1, 8)
    out1 = jax.block_until_ready(bottleneck_forward(x1, kp1, 2, 16))
    ref1 = bottleneck_reference(x1, p1, 2)
    assert out1.shape == (N, 16, H // 2, W // 2), out1.shape
    assert jnp.allclose(out1, ref1, atol=1e-2, rtol=1e-2), \
        float(jnp.max(jnp.abs(out1 - ref1)))

    # Config 2: identity shortcut (stride=1, Cin == Cout == 16) -> plain add,
    # no projection matmul inside the kernel.
    x2 = jax.random.normal(k_x2, (N, 16, H, W), jnp.float32)       # NCHW
    p2 = init_bottleneck_params(k_p2, 16, 16, 1)
    kp2 = prepare_kernel_params(p2, 16)
    out2 = jax.block_until_ready(bottleneck_forward(x2, kp2, 1, 16))
    ref2 = bottleneck_reference(x2, p2, 1)
    assert out2.shape == (N, 16, H, W), out2.shape
    assert jnp.allclose(out2, ref2, atol=1e-2, rtol=1e-2), \
        float(jnp.max(jnp.abs(out2 - ref2)))

    print("KERNEL_OK")
</pallas_src>

<mosaic_0001>
module attributes {stable_mosaic.version = 11 : i64} {
  func.func @_bottleneck_kernel_proj(%arg0: i32, %arg1: memref<1x8x8x128xbf16, #tpu.memory_space<vmem>>, %arg2: memref<128x256xbf16, #tpu.memory_space<vmem>>, %arg3: memref<1x128xf32, #tpu.memory_space<vmem>>, %arg4: memref<3x384x128xbf16, #tpu.memory_space<vmem>>, %arg5: memref<1x128xf32, #tpu.memory_space<vmem>>, %arg6: memref<128x128xbf16, #tpu.memory_space<vmem>>, %arg7: memref<1x128xf32, #tpu.memory_space<vmem>>, %arg8: memref<1x128xf32, #tpu.memory_space<vmem>>, %arg9: memref<1x8x8x128xf32, #tpu.memory_space<vmem>>, %arg10: memref<10x8x384xbf16, #tpu.memory_space<vmem>>) attributes {dimension_semantics = [#tpu.dimension_semantics<parallel>], iteration_bounds = array<i64: 2>, scalar_prefetch = 0 : i64, scratch_operands = 1 : i64, tpu.core_type = #tpu.core_type<tc>, window_params = [{transform_indices = @transform_0, window_bounds = array<i64: 1, 8, 8, 128>}, {pipeline_mode = #tpu.pipeline_mode<synchronous>, transform_indices = @transform_1, window_bounds = array<i64: 128, 256>}, {pipeline_mode = #tpu.pipeline_mode<synchronous>, transform_indices = @transform_2, window_bounds = array<i64: 1, 128>}, {pipeline_mode = #tpu.pipeline_mode<synchronous>, transform_indices = @transform_3, window_bounds = array<i64: 3, 384, 128>}, {pipeline_mode = #tpu.pipeline_mode<synchronous>, transform_indices = @transform_4, window_bounds = array<i64: 1, 128>}, {pipeline_mode = #tpu.pipeline_mode<synchronous>, transform_indices = @transform_5, window_bounds = array<i64: 128, 128>}, {pipeline_mode = #tpu.pipeline_mode<synchronous>, transform_indices = @transform_6, window_bounds = array<i64: 1, 128>}, {pipeline_mode = #tpu.pipeline_mode<synchronous>, transform_indices = @transform_7, window_bounds = array<i64: 1, 128>}, {transform_indices = @transform_8, window_bounds = array<i64: 1, 8, 8, 128>}]} {
    %c0 = arith.constant 0 : index
    %c0_0 = arith.constant 0 : index
    %c0_1 = arith.constant 0 : index
    %c0_2 = arith.constant 0 : index
    %0 = vector.load %arg1[%c0, %c0_0, %c0_1, %c0_2] : memref<1x8x8x128xbf16, #tpu.memory_space<vmem>>, vector<1x8x8x128xbf16>
    %1 = vector.shape_cast %0 : vector<1x8x8x128xbf16> to vector<8x8x128xbf16>
    %2 = vector.shape_cast %1 : vector<8x8x128xbf16> to vector<64x128xbf16>
    %c0_3 = arith.constant 0 : index
    %c0_4 = arith.constant 0 : index
    %3 = vector.load %arg2[%c0_3, %c0_4] : memref<128x256xbf16, #tpu.memory_space<vmem>>, vector<128x256xbf16>
    %cst = arith.constant dense<0.000000e+00> : vector<64x256xf32>
    %4 = tpu.matmul %2, %3, %cst {dimension_numbers = #tpu.dot_dimension_numbers<[1], [0], [0], [1], [0, 0, 1, 1], [], []>} : vector<64x128xbf16>, vector<128x256xbf16>, vector<64x256xf32> -> vector<64x256xf32>
    %5 = vector.extract_strided_slice %4 {offsets = [0, 0], sizes = [64, 128], strides = [1, 1]} : vector<64x256xf32> to vector<64x128xf32>
    %c0_5 = arith.constant 0 : index
    %c0_6 = arith.constant 0 : index
    %6 = vector.load %arg3[%c0_5, %c0_6] : memref<1x128xf32, #tpu.memory_space<vmem>>, vector<1x128xf32>
    %7 = vector.broadcast %6 : vector<1x128xf32> to vector<64x128xf32>
    %8 = arith.addf %5, %7 : vector<64x128xf32>
    %cst_7 = arith.constant 0.000000e+00 : f32
    %9 = vector.broadcast %cst_7 : f32 to vector<64x128xf32>
    %10 = arith.maximumf %8, %9 : vector<64x128xf32>
    %11 = vector.extract_strided_slice %4 {offsets = [0, 128], sizes = [64, 128], strides = [1, 1]} : vector<64x256xf32> to vector<64x128xf32>
    %c0_8 = arith.constant 0 : index
    %c0_9 = arith.constant 0 : index
    %12 = vector.load %arg8[%c0_8, %c0_9] : memref<1x128xf32, #tpu.memory_space<vmem>>, vector<1x128xf32>
    %13 = vector.broadcast %12 : vector<1x128xf32> to vector<64x128xf32>
    %14 = arith.addf %11, %13 : vector<64x128xf32>
    %cst_10 = arith.constant 0.000000e+00 : bf16
    %15 = vector.broadcast %cst_10 : bf16 to vector<8x384xbf16>
    %c0_11 = arith.constant 0 : index
    %c0_12 = arith.constant 0 : index
    %c0_13 = arith.constant 0 : index
    %16 = vector.load %arg10[%c0_11, %c0_12, %c0_13] : memref<10x8x384xbf16, #tpu.memory_space<vmem>>, vector<1x8x384xbf16>
    %17 = vector.shape_cast %16 : vector<1x8x384xbf16> to vector<8x384xbf16>
    %18 = vector.shape_cast %15 : vector<8x384xbf16> to vector<1x8x384xbf16>
    tpu.vector_store %arg10[%c0_11, %c0_12, %c0_13], %18 {strides = array<i32>} : memref<10x8x384xbf16, #tpu.memory_space<vmem>>, vector<1x8x384xbf16>,
    %c9 = arith.constant 9 : index
    %c0_14 = arith.constant 0 : index
    %c0_15 = arith.constant 0 : index
    %19 = vector.load %arg10[%c9, %c0_14, %c0_15] : memref<10x8x384xbf16, #tpu.memory_space<vmem>>, vector<1x8x384xbf16>
    %20 = vector.shape_cast %19 : vector<1x8x384xbf16> to vector<8x384xbf16>
    %21 = vector.shape_cast %15 : vector<8x384xbf16> to vector<1x8x384xbf16>
    tpu.vector_store %arg10[%c9, %c0_14, %c0_15], %21 {strides = array<i32>} : memref<10x8x384xbf16, #tpu.memory_space<vmem>>, vector<1x8x384xbf16>,
    %22 = tpu.iota {dimensions = array<i32: 1>} : vector<8x8x128xi32>
    %c1_i32 = arith.constant 1 : i32
    %23 = tpu.dynamic_rotate %10 by %c1_i32 dim 0 : vector<64x128xf32>, i32 -> vector<64x128xf32>
    %24 = vector.shape_cast %23 : vector<64x128xf32> to vector<8x8x128xf32>
    %c63_i32 = arith.constant 63 : i32
    %25 = tpu.dynamic_rotate %10 by %c63_i32 dim 0 : vector<64x128xf32>, i32 -> vector<64x128xf32>
    %26 = vector.shape_cast %25 : vector<64x128xf32> to vector<8x8x128xf32>
    %c0_i32 = arith.constant 0 : i32
    %27 = vector.broadcast %c0_i32 : i32 to vector<8x8x128xi32>
    %28 = arith.cmpi eq, %22, %27 : vector<8x8x128xi32>
    %cst_16 = arith.constant 0.000000e+00 : f32
    %29 = vector.broadcast %cst_16 : f32 to vector<8x8x128xf32>
    %30 = arith.select %28, %29, %24 : vector<8x8x128xi1>, vector<8x8x128xf32>
    %31 = arith.truncf %30 : vector<8x8x128xf32> to vector<8x8x128xbf16>
    %c1 = arith.constant 1 : index
    %c0_17 = arith.constant 0 : index
    %c0_18 = arith.constant 0 : index
    %32 = vector.load %arg10[%c1, %c0_17, %c0_18] : memref<10x8x384xbf16, #tpu.memory_space<vmem>>, vector<8x8x128xbf16>
    tpu.vector_store %arg10[%c1, %c0_17, %c0_18], %31 {strides = array<i32>} : memref<10x8x384xbf16, #tpu.memory_space<vmem>>, vector<8x8x128xbf16>,
    %33 = vector.shape_cast %10 : vector<64x128xf32> to vector<8x8x128xf32>
    %34 = arith.truncf %33 : vector<8x8x128xf32> to vector<8x8x128xbf16>
    %c1_19 = arith.constant 1 : index
    %c0_20 = arith.constant 0 : index
    %c128 = arith.constant 128 : index
    %35 = vector.load %arg10[%c1_19, %c0_20, %c128] : memref<10x8x384xbf16, #tpu.memory_space<vmem>>, vector<8x8x128xbf16>
    tpu.vector_store %arg10[%c1_19, %c0_20, %c128], %34 {strides = array<i32>} : memref<10x8x384xbf16, #tpu.memory_space<vmem>>, vector<8x8x128xbf16>,
    %c7_i32 = arith.constant 7 : i32
    %36 = vector.broadcast %c7_i32 : i32 to vector<8x8x128xi32>
    %37 = arith.cmpi eq, %22, %36 : vector<8x8x128xi32>
    %cst_21 = arith.constant 0.000000e+00 : f32
    %38 = vector.broadcast %cst_21 : f32 to vector<8x8x128xf32>
    %39 = arith.select %37, %38, %26 : vector<8x8x128xi1>, vector<8x8x128xf32>
    %40 = arith.truncf %39 : vector<8x8x128xf32> to vector<8x8x128xbf16>
    %c1_22 = arith.constant 1 : index
    %c0_23 = arith.constant 0 : index
    %c256 = arith.constant 256 : index
    %41 = vector.load %arg10[%c1_22, %c0_23, %c256] : memref<10x8x384xbf16, #tpu.memory_space<vmem>>, vector<8x8x128xbf16>
    tpu.vector_store %arg10[%c1_22, %c0_23, %c256], %40 {strides = array<i32>} : memref<10x8x384xbf16, #tpu.memory_space<vmem>>, vector<8x8x128xbf16>,
    %c0_24 = arith.constant 0 : index
    %c0_25 = arith.constant 0 : index
    %c0_26 = arith.constant 0 : index
    %42 = vector.load %arg10[%c0_24, %c0_25, %c0_26] : memref<10x8x384xbf16, #tpu.memory_space<vmem>>, vector<8x8x384xbf16>
    %43 = vector.shape_cast %42 : vector<8x8x384xbf16> to vector<64x384xbf16>
    %c0_27 = arith.constant 0 : index
    %c0_28 = arith.constant 0 : index
    %c0_29 = arith.constant 0 : index
    %44 = vector.load %arg4[%c0_27, %c0_28, %c0_29] : memref<3x384x128xbf16, #tpu.memory_space<vmem>>, vector<1x384x128xbf16>
    %45 = vector.shape_cast %44 : vector<1x384x128xbf16> to vector<384x128xbf16>
    %cst_30 = arith.constant dense<0.000000e+00> : vector<64x128xf32>
    %46 = tpu.matmul %43, %45, %cst_30 {dimension_numbers = #tpu.dot_dimension_numbers<[1], [0], [0], [1], [0, 0, 1, 1], [], []>} : vector<64x384xbf16>, vector<384x128xbf16>, vector<64x128xf32> -> vector<64x128xf32>
    %c1_31 = arith.constant 1 : index
    %c0_32 = arith.constant 0 : index
    %c0_33 = arith.constant 0 : index
    %47 = vector.load %arg10[%c1_31, %c0_32, %c0_33] : memref<10x8x384xbf16, #tpu.memory_space<vmem>>, vector<8x8x384xbf16>
    %48 = vector.shape_cast %47 : vector<8x8x384xbf16> to vector<64x384xbf16>
    %c1_34 = arith.constant 1 : index
    %c0_35 = arith.constant 0 : index
    %c0_36 = arith.constant 0 : index
    %49 = vector.load %arg4[%c1_34, %c0_35, %c0_36] : memref<3x384x128xbf16, #tpu.memory_space<vmem>>, vector<1x384x128xbf16>
    %50 = vector.shape_cast %49 : vector<1x384x128xbf16> to vector<384x128xbf16>
    %cst_37 = arith.constant dense<0.000000e+00> : vector<64x128xf32>
    %51 = tpu.matmul %48, %50, %cst_37 {dimension_numbers = #tpu.dot_dimension_numbers<[1], [0], [0], [1], [0, 0, 1, 1], [], []>} : vector<64x384xbf16>, vector<384x128xbf16>, vector<64x128xf32> -> vector<64x128xf32>
    %52 = arith.addf %46, %51 : vector<64x128xf32>
    %c2 = arith.constant 2 : index
    %c0_38 = arith.constant 0 : index
    %c0_39 = arith.constant 0 : index
    %53 = vector.load %arg10[%c2, %c0_38, %c0_39] : memref<10x8x384xbf16, #tpu.memory_space<vmem>>, vector<8x8x384xbf16>
    %54 = vector.shape_cast %53 : vector<8x8x384xbf16> to vector<64x384xbf16>
    %c2_40 = arith.constant 2 : index
    %c0_41 = arith.constant 0 : index
    %c0_42 = arith.constant 0 : index
    %55 = vector.load %arg4[%c2_40, %c0_41, %c0_42] : memref<3x384x128xbf16, #tpu.memory_space<vmem>>, vector<1x384x128xbf16>
    %56 = vector.shape_cast %55 : vector<1x384x128xbf16> to vector<384x128xbf16>
    %cst_43 = arith.constant dense<0.000000e+00> : vector<64x128xf32>
    %57 = tpu.matmul %54, %56, %cst_43 {dimension_numbers = #tpu.dot_dimension_numbers<[1], [0], [0], [1], [0, 0, 1, 1], [], []>} : vector<64x384xbf16>, vector<384x128xbf16>, vector<64x128xf32> -> vector<64x128xf32>
    %58 = arith.addf %52, %57 : vector<64x128xf32>
    %c0_44 = arith.constant 0 : index
    %c0_45 = arith.constant 0 : index
    %59 = vector.load %arg5[%c0_44, %c0_45] : memref<1x128xf32, #tpu.memory_space<vmem>>, vector<1x128xf32>
    %60 = vector.broadcast %59 : vector<1x128xf32> to vector<64x128xf32>
    %61 = arith.addf %58, %60 : vector<64x128xf32>
    %cst_46 = arith.constant 0.000000e+00 : f32
    %62 = vector.broadcast %cst_46 : f32 to vector<64x128xf32>
    %63 = arith.maximumf %61, %62 : vector<64x128xf32>
    %64 = arith.truncf %63 : vector<64x128xf32> to vector<64x128xbf16>
    %c0_47 = arith.constant 0 : index
    %c0_48 = arith.constant 0 : index
    %65 = vector.load %arg6[%c0_47, %c0_48] : memref<128x128xbf16, #tpu.memory_space<vmem>>, vector<128x128xbf16>
    %cst_49 = arith.constant dense<0.000000e+00> : vector<64x128xf32>
    %66 = tpu.matmul %64, %65, %cst_49 {dimension_numbers = #tpu.dot_dimension_numbers<[1], [0], [0], [1], [0, 0, 1, 1], [], []>} : vector<64x128xbf16>, vector<128x128xbf16>, vector<64x128xf32> -> vector<64x128xf32>
    %c0_50 = arith.constant 0 : index
    %c0_51 = arith.constant 0 : index
    %67 = vector.load %arg7[%c0_50, %c0_51] : memref<1x128xf32, #tpu.memory_space<vmem>>, vector<1x128xf32>
    %68 = vector.broadcast %67 : vector<1x128xf32> to vector<64x128xf32>
    %69 = arith.addf %66, %68 : vector<64x128xf32>
    %70 = arith.addf %69, %14 : vector<64x128xf32>
    %cst_52 = arith.constant 0.000000e+00 : f32
    %71 = vector.broadcast %cst_52 : f32 to vector<64x128xf32>
    %72 = arith.maximumf %70, %71 : vector<64x128xf32>
    %73 = vector.shape_cast %72 : vector<64x128xf32> to vector<8x8x128xf32>
    %c0_53 = arith.constant 0 : index
    %c0_54 = arith.constant 0 : index
    %c0_55 = arith.constant 0 : index
    %c0_56 = arith.constant 0 : index
    %74 = vector.load %arg9[%c0_53, %c0_54, %c0_55, %c0_56] : memref<1x8x8x128xf32, #tpu.memory_space<vmem>>, vector<1x8x8x128xf32>
    %75 = vector.shape_cast %74 : vector<1x8x8x128xf32> to vector<8x8x128xf32>
    %76 = vector.shape_cast %73 : vector<8x8x128xf32> to vector<1x8x8x128xf32>
    tpu.vector_store %arg9[%c0_53, %c0_54, %c0_55, %c0_56], %76 {strides = array<i32>} : memref<1x8x8x128xf32, #tpu.memory_space<vmem>>, vector<1x8x8x128xf32>,
    return
  }
  func.func @transform_0(%arg0: i32) -> (i32, i32, i32, i32) {
    %c0_i32 = arith.constant 0 : i32
    %c0_i32_0 = arith.constant 0 : i32
    %c0_i32_1 = arith.constant 0 : i32
    %c0_i32_2 = arith.constant 0 : i32
    return %arg0, %c0_i32, %c0_i32_0, %c0_i32_1 : i32, i32, i32, i32
  }
  func.func @transform_1(%arg0: i32) -> (i32, i32) {
    %c0_i32 = arith.constant 0 : i32
    %c0_i32_0 = arith.constant 0 : i32
    %c0_i32_1 = arith.constant 0 : i32
    return %c0_i32, %c0_i32_0 : i32, i32
  }
  func.func @transform_2(%arg0: i32) -> (i32, i32) {
    %c0_i32 = arith.constant 0 : i32
    %c0_i32_0 = arith.constant 0 : i32
    %c0_i32_1 = arith.constant 0 : i32
    return %c0_i32, %c0_i32_0 : i32, i32
  }
  func.func @transform_3(%arg0: i32) -> (i32, i32, i32) {
    %c0_i32 = arith.constant 0 : i32
    %c0_i32_0 = arith.constant 0 : i32
    %c0_i32_1 = arith.constant 0 : i32
    %c0_i32_2 = arith.constant 0 : i32
    return %c0_i32, %c0_i32_0, %c0_i32_1 : i32, i32, i32
  }
  func.func @transform_4(%arg0: i32) -> (i32, i32) {
    %c0_i32 = arith.constant 0 : i32
    %c0_i32_0 = arith.constant 0 : i32
    %c0_i32_1 = arith.constant 0 : i32
    return %c0_i32, %c0_i32_0 : i32, i32
  }
  func.func @transform_5(%arg0: i32) -> (i32, i32) {
    %c0_i32 = arith.constant 0 : i32
    %c0_i32_0 = arith.constant 0 : i32
    %c0_i32_1 = arith.constant 0 : i32
    return %c0_i32, %c0_i32_0 : i32, i32
  }
  func.func @transform_6(%arg0: i32) -> (i32, i32) {
    %c0_i32 = arith.constant 0 : i32
    %c0_i32_0 = arith.constant 0 : i32
    %c0_i32_1 = arith.constant 0 : i32
    return %c0_i32, %c0_i32_0 : i32, i32
  }
  func.func @transform_7(%arg0: i32) -> (i32, i32) {
    %c0_i32 = arith.constant 0 : i32
    %c0_i32_0 = arith.constant 0 : i32
    %c0_i32_1 = arith.constant 0 : i32
    return %c0_i32, %c0_i32_0 : i32, i32
  }
  func.func @transform_8(%arg0: i32) -> (i32, i32, i32, i32) {
    %c0_i32 = arith.constant 0 : i32
    %c0_i32_0 = arith.constant 0 : i32
    %c0_i32_1 = arith.constant 0 : i32
    %c0_i32_2 = arith.constant 0 : i32
    return %arg0, %c0_i32, %c0_i32_0, %c0_i32_1 : i32, i32, i32, i32
  }
}

</mosaic_0001>

<llo_original>
// kernel: bottleneck_forward.1
$region0: #{bottleneck_forward.1}
  #allocation0 [shape = 'u32[]', space=smem, size = 0x4, offset = 0x4, fixed_abs, tag = 'smem constant byte address 0x4 - core index']
  #allocation1 [shape = 'u32[144,128]{1,0:T(1,128)}', space=vmem, size = 0x12000, scoped, tag = 'internal scratch']
  #allocation2 [shape = 'bf16[10,8,384]{2,1,0:T(8,128)(2,1)}', space=vmem, size = 0xf000, scoped, tag = 'scratch operand']
  %s0 = inlined_call_operand.vmem [shape: bf16[2,8,8,128], index: 0, kind: input, shape index: {}]
  %s1 = inlined_call_operand.vmem [shape: bf16[128,256], index: 1, kind: input, shape index: {}]
  %s2 = inlined_call_operand.vmem [shape: f32[1,128], index: 2, kind: input, shape index: {}]
  %s3 = inlined_call_operand.vmem [shape: bf16[3,384,128], index: 3, kind: input, shape index: {}]
  %s4 = inlined_call_operand.vmem [shape: f32[1,128], index: 4, kind: input, shape index: {}]
  %s5 = inlined_call_operand.vmem [shape: bf16[128,128], index: 5, kind: input, shape index: {}]
  %s6 = inlined_call_operand.vmem [shape: f32[1,128], index: 6, kind: input, shape index: {}]
  %s7 = inlined_call_operand.vmem [shape: f32[1,128], index: 7, kind: input, shape index: {}]
  %s8 = inlined_call_operand.vmem [shape: f32[2,8,8,128], index: 8, kind: output, shape index: {}]
  %s9 = sld [smem:[#allocation0]]
  $region65: #{bottleneck_forward.1} parent=0
    _
  %s11 = ssub.s32 1, %s9
  %s12 = scalar_select 0, %s11, %s9
  loop: start=0, step=1, limit=4
  $region2: #{bottleneck_forward.1} parent=0 // loop_pre_header
    _
  $region3: #{bottleneck_forward.1} parent=0 // loop_header
    %s14 = sphi 0, %s18
    %p15 = scmp.ge.s32.totalorder %s14, 4
    %s24 = sphi 0, %s26
    %s27 = sphi 0, %s24
    %s28 = sphi 0, %s27
    %s44 = sphi 0, %s28
    %s48 = sphi 0, %s48
    %s50 = sphi 0, %s48
    %s51 = sphi 0, %s50
    %s65 = sphi 0, %s51
    %s69 = sphi 0, %s69
    %s71 = sphi 0, %s69
    %s72 = sphi 0, %s71
    %s86 = sphi 0, %s72
    %s90 = sphi 0, %s90
    %s92 = sphi 0, %s90
    %s93 = sphi 0, %s92
    %s107 = sphi 0, %s93
    %s111 = sphi 0, %s111
    %s113 = sphi 0, %s111
    %s114 = sphi 0, %s113
    %s128 = sphi 0, %s114
    %s132 = sphi 0, %s132
    %s134 = sphi 0, %s132
    %s135 = sphi 0, %s134
    %s149 = sphi 0, %s135
    %s153 = sphi 0, %s153
    %s155 = sphi 0, %s153
    %s156 = sphi 0, %s155
    %s170 = sphi 0, %s156
    %s174 = sphi 0, %s174
    %s176 = sphi 0, %s174
    %s177 = sphi 0, %s176
    %s191 = sphi 0, %s177
    %s197 = sphi 0, %s199
    %s200 = sphi 0, %s197
    %s201 = sphi 0, %s200
    %s217 = sphi 0, %s201
  $region4: #{bottleneck_forward.1} parent=0 // loop_header_branch
    %17 = sbr.rel (%p15) target = $region8
  $region5: #{bottleneck_forward.1} parent=0 // loop_body
    %s19 = ssub.s32 %s14, 1
    %s20 = ssub.s32 %s14, 2
    %s21 = sadd.s32 %s14, 1
    %s22 = ssub.s32 %s14, %s21
    %p23 = scmp.eq.s32.totalorder %s22, 0
    %s25 = sadd.s32 %s24, 1
    %s26 = scalar_select %p23, %s24, %s25
    %p29 = pneg %p23
    %p30 = scmp.eq.s32.totalorder %s14, 1
    %p31 = por %p29, %p30
    %p32 = scmp.ne.s32.totalorder %s24, %s27
    %p33 = scmp.eq.s32.totalorder %s14, 0
    %p34 = por %p32, %p33
    %p35 = scmp.ne.s32.totalorder %s24, %s27
    %p36 = scmp.eq.s32.totalorder %s19, 1
    %p37 = por %p35, %p36
    %p38 = scmp.ne.s32.totalorder %s27, %s28
    %p39 = scmp.eq.s32.totalorder %s19, 0
    %p40 = por %p38, %p39
    %p41 = scmp.ne.s32.totalorder %s27, %s28
    %p42 = scmp.eq.s32.totalorder %s20, 1
    %p43 = por %p41, %p42
    %p45 = scmp.ne.s32.totalorder %s28, %s44
    %p46 = scmp.eq.s32.totalorder %s20, 0
    %p47 = por %p45, %p46
    %s49 = sadd.s32 %s48, 1
    %p52 = scmp.eq.s32.totalorder %s14, 1
    %p53 = scmp.ne.s32.totalorder %s48, %s50
    %p54 = scmp.eq.s32.totalorder %s14, 0
    %p55 = por %p53, %p54
    %p56 = scmp.ne.s32.totalorder %s48, %s50
    %p57 = scmp.eq.s32.totalorder %s19, 1
    %p58 = por %p56, %p57
    %p59 = scmp.ne.s32.totalorder %s50, %s51
    %p60 = scmp.eq.s32.totalorder %s19, 0
    %p61 = por %p59, %p60
    %p62 = scmp.ne.s32.totalorder %s50, %s51
    %p63 = scmp.eq.s32.totalorder %s20, 1
    %p64 = por %p62, %p63
    %p66 = scmp.ne.s32.totalorder %s51, %s65
    %p67 = scmp.eq.s32.totalorder %s20, 0
    %p68 = por %p66, %p67
    %s70 = sadd.s32 %s69, 1
    %p73 = scmp.eq.s32.totalorder %s14, 1
    %p74 = scmp.ne.s32.totalorder %s69, %s71
    %p75 = scmp.eq.s32.totalorder %s14, 0
    %p76 = por %p74, %p75
    %p77 = scmp.ne.s32.totalorder %s69, %s71
    %p78 = scmp.eq.s32.totalorder %s19, 1
    %p79 = por %p77, %p78
    %p80 = scmp.ne.s32.totalorder %s71, %s72
    %p81 = scmp.eq.s32.totalorder %s19, 0
    %p82 = por %p80, %p81
    %p83 = scmp.ne.s32.totalorder %s71, %s72
    %p84 = scmp.eq.s32.totalorder %s20, 1
    %p85 = por %p83, %p84
    %p87 = scmp.ne.s32.totalorder %s72, %s86
    %p88 = scmp.eq.s32.totalorder %s20, 0
    %p89 = por %p87, %p88
    %s91 = sadd.s32 %s90, 1
    %p94 = scmp.eq.s32.totalorder %s14, 1
    %p95 = scmp.ne.s32.totalorder %s90, %s92
    %p96 = scmp.eq.s32.totalorder %s14, 0
    %p97 = por %p95, %p96
    %p98 = scmp.ne.s32.totalorder %s90, %s92
    %p99 = scmp.eq.s32.totalorder %s19, 1
    %p100 = por %p98, %p99
    %p101 = scmp.ne.s32.totalorder %s92, %s93
    %p102 = scmp.eq.s32.totalorder %s19, 0
    %p103 = por %p101, %p102
    %p104 = scmp.ne.s32.totalorder %s92, %s93
    %p105 = scmp.eq.s32.totalorder %s20, 1
    %p106 = por %p104, %p105
    %p108 = scmp.ne.s32.totalorder %s93, %s107
    %p109 = scmp.eq.s32.totalorder %s20, 0
    %p110 = por %p108, %p109
    %s112 = sadd.s32 %s111, 1
    %p115 = scmp.eq.s32.totalorder %s14, 1
    %p116 = scmp.ne.s32.totalorder %s111, %s113
    %p117 = scmp.eq.s32.totalorder %s14, 0
    %p118 = por %p116, %p117
    %p119 = scmp.ne.s32.totalorder %s111, %s113
    %p120 = scmp.eq.s32.totalorder %s19, 1
    %p121 = por %p119, %p120
    %p122 = scmp.ne.s32.totalorder %s113, %s114
    %p123 = scmp.eq.s32.totalorder %s19, 0
    %p124 = por %p122, %p123
    %p125 = scmp.ne.s32.totalorder %s113, %s114
    %p126 = scmp.eq.s32.totalorder %s20, 1
    %p127 = por %p125, %p126
    %p129 = scmp.ne.s32.totalorder %s114, %s128
    %p130 = scmp.eq.s32.totalorder %s20, 0
    %p131 = por %p129, %p130
    %s133 = sadd.s32 %s132, 1
    %p136 = scmp.eq.s32.totalorder %s14, 1
    %p137 = scmp.ne.s32.totalorder %s132, %s134
    %p138 = scmp.eq.s32.totalorder %s14, 0
    %p139 = por %p137, %p138
    %p140 = scmp.ne.s32.totalorder %s132, %s134
    %p141 = scmp.eq.s32.totalorder %s19, 1
    %p142 = por %p140, %p141
    %p143 = scmp.ne.s32.totalorder %s134, %s135
    %p144 = scmp.eq.s32.totalorder %s19, 0
    %p145 = por %p143, %p144
    %p146 = scmp.ne.s32.totalorder %s134, %s135
    %p147 = scmp.eq.s32.totalorder %s20, 1
    %p148 = por %p146, %p147
    %p150 = scmp.ne.s32.totalorder %s135, %s149
    %p151 = scmp.eq.s32.totalorder %s20, 0
    %p152 = por %p150, %p151
    %s154 = sadd.s32 %s153, 1
    %p157 = scmp.eq.s32.totalorder %s14, 1
    %p158 = scmp.ne.s32.totalorder %s153, %s155
    %p159 = scmp.eq.s32.totalorder %s14, 0
    %p160 = por %p158, %p159
    %p161 = scmp.ne.s32.totalorder %s153, %s155
    %p162 = scmp.eq.s32.totalorder %s19, 1
    %p163 = por %p161, %p162
    %p164 = scmp.ne.s32.totalorder %s155, %s156
    %p165 = scmp.eq.s32.totalorder %s19, 0
    %p166 = por %p164, %p165
    %p167 = scmp.ne.s32.totalorder %s155, %s156
    %p168 = scmp.eq.s32.totalorder %s20, 1
    %p169 = por %p167, %p168
    %p171 = scmp.ne.s32.totalorder %s156, %s170
    %p172 = scmp.eq.s32.totalorder %s20, 0
    %p173 = por %p171, %p172
    %s175 = sadd.s32 %s174, 1
    %p178 = scmp.eq.s32.totalorder %s14, 1
    %p179 = scmp.ne.s32.totalorder %s174, %s176
    %p180 = scmp.eq.s32.totalorder %s14, 0
    %p181 = por %p179, %p180
    %p182 = scmp.ne.s32.totalorder %s174, %s176
    %p183 = scmp.eq.s32.totalorder %s19, 1
    %p184 = por %p182, %p183
    %p185 = scmp.ne.s32.totalorder %s176, %s177
    %p186 = scmp.eq.s32.totalorder %s19, 0
    %p187 = por %p185, %p186
    %p188 = scmp.ne.s32.totalorder %s176, %s177
    %p189 = scmp.eq.s32.totalorder %s20, 1
    %p190 = por %p188, %p189
    %p192 = scmp.ne.s32.totalorder %s177, %s191
    %p193 = scmp.eq.s32.totalorder %s20, 0
    %p194 = por %p192, %p193
    %s195 = ssub.s32 %s14, %s21
    %p196 = scmp.eq.s32.totalorder %s195, 0
    %s198 = sadd.s32 %s197, 1
    %s199 = scalar_select %p196, %s197, %s198
    %p202 = pneg %p196
    %p203 = scmp.eq.s32.totalorder %s14, 1
    %p204 = por %p202, %p203
    %p205 = scmp.ne.s32.totalorder %s197, %s200
    %p206 = scmp.eq.s32.totalorder %s14, 0
    %p207 = por %p205, %p206
    %p208 = scmp.ne.s32.totalorder %s197, %s200
    %p209 = scmp.eq.s32.totalorder %s19, 1
    %p210 = por %p208, %p209
    %p211 = scmp.ne.s32.totalorder %s200, %s201
    %p212 = scmp.eq.s32.totalorder %s19, 0
    %p213 = por %p211, %p212
    %p214 = scmp.ne.s32.totalorder %s200, %s201
    %p215 = scmp.eq.s32.totalorder %s20, 1
    %p216 = por %p214, %p215
    %p218 = scmp.ne.s32.totalorder %s201, %s217
    %p219 = scmp.eq.s32.totalorder %s20, 0
    %p220 = por %p218, %p219
    %p221 = scmp.le.s32.totalorder 1, %s14
    %p222 = scmp.lt.s32.totalorder %s14, 3
    %p223 = pnand %p221, %p222
    %p224 = pneg %p223
    // Predicated region
    $region9: #{bottleneck_forward.1} parent=5 // pred_check
      _
    $region10: #{bottleneck_forward.1} parent=5 // pred_check_branch
      %226 = sbr.rel (%p223) target = $region12
    $region11: #{bottleneck_forward.1} parent=5 // pred_region
      %s227 = ssub.s32 %s14, 1
      // Predicated region
      $region13: #{bottleneck_forward.1} parent=11 // pred_check
        %p228 = pneg %p61
      $region14: #{bottleneck_forward.1} parent=11 // pred_check_branch
        %230 = sbr.rel (%p228) target = $region16
      $region15: #{bottleneck_forward.1} parent=11 // pred_region
        _
      $region16: #{bottleneck_forward.1} parent=11 // pred_fallthru
        _
      // Predicated region
      $region17: #{bottleneck_forward.1} parent=11 // pred_check
        %p231 = pneg %p82
      $region18: #{bottleneck_forward.1} parent=11 // pred_check_branch
        %233 = sbr.rel (%p231) target = $region20
      $region19: #{bottleneck_forward.1} parent=11 // pred_region
        _
      $region20: #{bottleneck_forward.1} parent=11 // pred_fallthru
        _
      // Predicated region
      $region21: #{bottleneck_forward.1} parent=11 // pred_check
        %p234 = pneg %p103
      $region22: #{bottleneck_forward.1} parent=11 // pred_check_branch
        %236 = sbr.rel (%p234) target = $region24
      $region23: #{bottleneck_forward.1} parent=11 // pred_region
        _
      $region24: #{bottleneck_forward.1} parent=11 // pred_fallthru
        _
      // Predicated region
      $region25: #{bottleneck_forward.1} parent=11 // pred_check
        %p237 = pneg %p124
      $region26: #{bottleneck_forward.1} parent=11 // pred_check_branch
        %239 = sbr.rel (%p237) target = $region28
      $region27: #{bottleneck_forward.1} parent=11 // pred_region
        _
      $region28: #{bottleneck_forward.1} parent=11 // pred_fallthru
        _
      // Predicated region
      $region29: #{bottleneck_forward.1} parent=11 // pred_check
        %p240 = pneg %p145
      $region30: #{bottleneck_forward.1} parent=11 // pred_check_branch
        %242 = sbr.rel (%p240) target = $region32
      $region31: #{bottleneck_forward.1} parent=11 // pred_region
        _
      $region32: #{bottleneck_forward.1} parent=11 // pred_fallthru
        _
      // Predicated region
      $region33: #{bottleneck_forward.1} parent=11 // pred_check
        %p243 = pneg %p166
      $region34: #{bottleneck_forward.1} parent=11 // pred_check_branch
        %245 = sbr.rel (%p243) target = $region36
      $region35: #{bottleneck_forward.1} parent=11 // pred_region
        _
      $region36: #{bottleneck_forward.1} parent=11 // pred_fallthru
        _
      // Predicated region
      $region37: #{bottleneck_forward.1} parent=11 // pred_check
        %p246 = pneg %p187
      $region38: #{bottleneck_forward.1} parent=11 // pred_check_branch
        %248 = sbr.rel (%p246) target = $region40
      $region39: #{bottleneck_forward.1} parent=11 // pred_region
        _
      $region40: #{bottleneck_forward.1} parent=11 // pred_fallthru
        _
    $region12: #{bottleneck_forward.1} parent=5 // pred_fallthru
      _
    %p249 = scmp.lt.s32.totalorder %s14, 2
    // Predicated region
    $region41: #{bottleneck_forward.1} parent=5 // pred_check
      %p250 = pneg %p249
    $region42: #{bottleneck_forward.1} parent=5 // pred_check_branch
      %252 = sbr.rel (%p250) target = $region44
    $region43: #{bottleneck_forward.1} parent=5 // pred_region
      // Predicated region
      $region45: #{bottleneck_forward.1} parent=43 // pred_check
        %p253 = pneg %p34
      $region46: #{bottleneck_forward.1} parent=43 // pred_check_branch
        %255 = sbr.rel (%p253) target = $region48
      $region47: #{bottleneck_forward.1} parent=43 // pred_region
        %p256 = scmp.lt.s32.totalorder %s14, 1
        %s257 = scalar_select %p256, %s14, 1
        %s258 = smul.addr %s257, 8
        %s259 = smul.addr %s258, 4
        %s260 = scalar_lea.vmem %s0, %s259
      $region48: #{bottleneck_forward.1} parent=43 // pred_fallthru
        _
    $region44: #{bottleneck_forward.1} parent=5 // pred_fallthru
      _
    %p261 = scmp.le.s32.totalorder 1, %s14
    %p262 = scmp.lt.s32.totalorder %s14, 3
    %p263 = pnand %p261, %p262
    %p264 = pneg %p263
    // Predicated region
    $region49: #{bottleneck_forward.1} parent=5 // pred_check
      _
    $region50: #{bottleneck_forward.1} parent=5 // pred_check_branch
      %266 = sbr.rel (%p263) target = $region52
    $region51: #{bottleneck_forward.1} parent=5 // pred_region
      %s267 = ssub.s32 %s14, 1
      %p268 = scmp.lt.s32.totalorder %s19, 1
      %s269 = scalar_select %p268, %s19, 1
      %s270 = smul.addr %s269, 8
      %s271 = smul.addr %s270, 4
      %s272 = scalar_lea.vmem %s0, %s271
      %p273 = pneg %p40
      %p274 = pneg %p37
      %p275 = pneg %p61
      %p276 = pneg %p58
      %p277 = pneg %p82
      %p278 = pneg %p79
      %p279 = pneg %p103
      %p280 = pneg %p100
      %p281 = pneg %p124
      %p282 = pneg %p121
      %p283 = pneg %p145
      %p284 = pneg %p142
      %p285 = pneg %p166
      %p286 = pneg %p163
      %p287 = pneg %p187
      %p288 = pneg %p184
      %p289 = pneg %p213
      %p290 = pneg %p210
      %p291 = scmp.lt.s32.totalorder %s19, 1
      %s292 = scalar_select %p291, %s19, 1
      %s293 = smul.addr %s292, 8
      %s294 = smul.addr %s293, 8
      %s295 = scalar_lea.vmem %s8, %s294
      %p296 = scmp.lt.s32.totalorder %s19, 1
      %s297 = scalar_select %p296, %s19, 1
      %s298 = smul.addr %s297, 8
      %s299 = smul.addr %s298, 4
      %s300 = scalar_lea.vmem %s0, %s299
      %p301 = scmp.lt.s32.totalorder %s19, 1
      %s302 = scalar_select %p301, %s19, 1
      %s303 = smul.addr %s302, 8
      %s304 = smul.addr %s303, 8
      %s305 = scalar_lea.vmem %s8, %s304
      %v307 = vld [vmem:[%s300] sm:$0xf]
      %v308 = vld [vmem:[%s300 + $0x4] sm:$0xf]
      %v309 = vld [vmem:[%s300 + $0x8] sm:$0xf]
      %v310 = vld [vmem:[%s300 + $0xc] sm:$0xf]
      %v311 = vld [vmem:[%s300 + $0x10] sm:$0xf]
      %v312 = vld [vmem:[%s300 + $0x14] sm:$0xf]
      %v313 = vld [vmem:[%s300 + $0x18] sm:$0xf]
      %v314 = vld [vmem:[%s300 + $0x1c] sm:$0xf]
      %v315 = vld [vmem:[%s1] sm:$0xff]
      %v316 = vld [vmem:[%s1 + $0x8] sm:$0xff]
      %v317 = vld [vmem:[%s1 + $0x10] sm:$0xff]
      %v318 = vld [vmem:[%s1 + $0x18] sm:$0xff]
      %v319 = vld [vmem:[%s1 + $0x20] sm:$0xff]
      %v320 = vld [vmem:[%s1 + $0x28] sm:$0xff]
      %v321 = vld [vmem:[%s1 + $0x30] sm:$0xff]
      %v322 = vld [vmem:[%s1 + $0x38] sm:$0xff]
      %v323 = vld [vmem:[%s1 + $0x40] sm:$0xff]
      %v324 = vld [vmem:[%s1 + $0x48] sm:$0xff]
      %v325 = vld [vmem:[%s1 + $0x50] sm:$0xff]
      %v326 = vld [vmem:[%s1 + $0x58] sm:$0xff]
      %v327 = vld [vmem:[%s1 + $0x60] sm:$0xff]
      %v328 = vld [vmem:[%s1 + $0x68] sm:$0xff]
      %v329 = vld [vmem:[%s1 + $0x70] sm:$0xff]
      %v330 = vld [vmem:[%s1 + $0x78] sm:$0xff]
      %v339 = vunpack.c.l.b16 %v307
      %v340 = vunpack.c.l.b16 %v308
      %v341 = vunpack.c.l.b16 %v309
      %v342 = vunpack.c.l.b16 %v310
      %v343 = vunpack.c.l.b16 %v311
      %v344 = vunpack.c.l.b16 %v312
      %v345 = vunpack.c.l.b16 %v313
      %v346 = vunpack.c.l.b16 %v314
      %v347 = vpack.c.b16 %v340, %v339
      %v348 = vpack.c.b16 %v342, %v341
      %v349 = vpack.c.b16 %v344, %v343
      %v350 = vpack.c.b16 %v346, %v345
      %v371 = vunpack.c.l.b16 %v315
      %v372 = vunpack.c.h.b16 %v315
      %v373 = vunpack.c.l.b16 %v316
      %v374 = vunpack.c.h.b16 %v316
      %v375 = vunpack.c.l.b16 %v317
      %v376 = vunpack.c.h.b16 %v317
      %v377 = vunpack.c.l.b16 %v318
      %v378 = vunpack.c.h.b16 %v318
      %v379 = vunpack.c.l.b16 %v319
      %v380 = vunpack.c.h.b16 %v319
      %v381 = vunpack.c.l.b16 %v320
      %v382 = vunpack.c.h.b16 %v320
      %v383 = vunpack.c.l.b16 %v321
      %v384 = vunpack.c.h.b16 %v321
      %v385 = vunpack.c.l.b16 %v322
      %v386 = vunpack.c.h.b16 %v322
      %v387 = vunpack.c.l.b16 %v323
      %v388 = vunpack.c.h.b16 %v323
      %v389 = vunpack.c.l.b16 %v324
      %v390 = vunpack.c.h.b16 %v324
      %v391 = vunpack.c.l.b16 %v325
      %v392 = vunpack.c.h.b16 %v325
      %v393 = vunpack.c.l.b16 %v326
      %v394 = vunpack.c.h.b16 %v326
      %v395 = vunpack.c.l.b16 %v327
      %v396 = vunpack.c.h.b16 %v327
      %v397 = vunpack.c.l.b16 %v328
      %v398 = vunpack.c.h.b16 %v328
      %v399 = vunpack.c.l.b16 %v329
      %v400 = vunpack.c.h.b16 %v329
      %v401 = vunpack.c.l.b16 %v330
      %v402 = vunpack.c.h.b16 %v330
      %v403 = vpack.c.b16 %v373, %v371
      %v404 = vpack.c.b16 %v374, %v372
      %v405 = vpack.c.b16 %v377, %v375
      %v406 = vpack.c.b16 %v378, %v376
      %v407 = vpack.c.b16 %v381, %v379
      %v408 = vpack.c.b16 %v382, %v380
      %v409 = vpack.c.b16 %v385, %v383
      %v410 = vpack.c.b16 %v386, %v384
      %v411 = vpack.c.b16 %v389, %v387
      %v412 = vpack.c.b16 %v390, %v388
      %v413 = vpack.c.b16 %v393, %v391
      %v414 = vpack.c.b16 %v394, %v392
      %v415 = vpack.c.b16 %v397, %v395
      %v416 = vpack.c.b16 %v398, %v396
      %v417 = vpack.c.b16 %v401, %v399
      %v418 = vpack.c.b16 %v402, %v400
      %435 = vmatprep.subr.bf16.mxu0 %v418
      %436 = vmatpush1.bf16.msra.mxu0 %v417
      %437 = vmatprep.subr.bf16.mxu0 %v416
      %438 = vmatpush1.bf16.msra.mxu0 %v415
      %439 = vmatprep.subr.bf16.mxu0 %v414
      %440 = vmatpush1.bf16.msra.mxu0 %v413
      %441 = vmatprep.subr.bf16.mxu0 %v412
      %442 = vmatpush1.bf16.msra.mxu0 %v411
      %443 = vmatprep.subr.bf16.mxu0 %v410
      %444 = vmatpush1.bf16.msra.mxu0 %v409
      %445 = vmatprep.subr.bf16.mxu0 %v408
      %446 = vmatpush1.bf16.msra.mxu0 %v407
      %447 = vmatprep.subr.bf16.mxu0 %v406
      %448 = vmatpush1.bf16.msra.mxu0 %v405
      %449 = vmatprep.subr.bf16.mxu0 %v404
      %450 = vmatpush1.bf16.msra.mxu0 %v403
      %451 = vmatprep.subr.bf16.mxu0 0
      %452 = vmatpush2.bf16.msra.mxu0 0
      %453 = vmatprep.subr.bf16.mxu0 0
      %454 = vmatpush2.bf16.msra.mxu0 0
      %455 = vmatprep.subr.bf16.mxu0 0
      %456 = vmatpush2.bf16.msra.mxu0 0
      %457 = vmatprep.subr.bf16.mxu0 0
      %458 = vmatpush2.bf16.msra.mxu0 0
      %459 = vmatprep.subr.bf16.mxu0 0
      %460 = vmatpush2.bf16.msra.mxu0 0
      %461 = vmatprep.subr.bf16.mxu0 0
      %462 = vmatpush2.bf16.msra.mxu0 0
      %463 = vmatprep.subr.bf16.mxu0 0
      %464 = vmatpush2.bf16.msra.mxu0 0
      %465 = vmatprep.subr.bf16.mxu0 0
      %466 = vmatpush2.bf16.msra.mxu0 0
      %467 = vmatprep.mubr.bf16.mxu0 0
      %468 = vmatmul.mubr.bf16.gmra.mxu0 %v347
      %v469 = vpop.f32.mrf.mxu0
      %v470 = vadd.f32 0.0, %v469
      %v471 = vpop.f32.mrf.mxu0
      %v472 = vadd.f32 0.0, %v471
      %v473 = vpop.f32.mrf.mxu0
      %v474 = vadd.f32 0.0, %v473
      %v475 = vpop.f32.mrf.mxu0
      %v476 = vadd.f32 0.0, %v475
      %477 = vmatprep.mubr.bf16.mxu0 0
      %478 = vmatmul.mubr.bf16.gmra.mxu0 %v348
      %v479 = vpop.f32.mrf.mxu0
      %v480 = vadd.f32 0.0, %v479
      %v481 = vpop.f32.mrf.mxu0
      %v482 = vadd.f32 0.0, %v481
      %v483 = vpop.f32.mrf.mxu0
      %v484 = vadd.f32 0.0, %v483
      %v485 = vpop.f32.mrf.mxu0
      %v486 = vadd.f32 0.0, %v485
      %487 = vmatprep.mubr.bf16.mxu0 0
      %488 = vmatmul.mubr.bf16.gmra.mxu0 %v349
      %v489 = vpop.f32.mrf.mxu0
      %v490 = vadd.f32 0.0, %v489
      %v491 = vpop.f32.mrf.mxu0
      %v492 = vadd.f32 0.0, %v491
      %v493 = vpop.f32.mrf.mxu0
      %v494 = vadd.f32 0.0, %v493
      %v495 = vpop.f32.mrf.mxu0
      %v496 = vadd.f32 0.0, %v495
      %497 = vmatprep.mubr.bf16.mxu0 0
      %498 = vmatmul.mubr.bf16.gmra.mxu0 %v350
      %v499 = vpop.f32.mrf.mxu0
      %v500 = vadd.f32 0.0, %v499
      %v501 = vpop.f32.mrf.mxu0
      %v502 = vadd.f32 0.0, %v501
      %v503 = vpop.f32.mrf.mxu0
      %v504 = vadd.f32 0.0, %v503
      %v505 = vpop.f32.mrf.mxu0
      %v506 = vadd.f32 0.0, %v505
      %507 = vdwg.mxu0
      %v508 = vld [vmem:[%s2] sm:$0x1]
      %v510 = vlaneseq
      %v511 = vshrl.u32 %v510, 7
      %v512 = vsub.s32 0, %v511
      %v513 = vrot.slane %v508, %v512
      %v515 = vadd.f32 %v470, %v513
      %v516 = vadd.f32 %v474, %v513
      %v517 = vadd.f32 %v480, %v513
      %v518 = vadd.f32 %v484, %v513
      %v519 = vadd.f32 %v490, %v513
      %v520 = vadd.f32 %v494, %v513
      %v521 = vadd.f32 %v500, %v513
      %v522 = vadd.f32 %v504, %v513
      %v523 = vmax.f32 %v515, 0.0
      %v524 = vmax.f32 %v516, 0.0
      %v525 = vmax.f32 %v517, 0.0
      %v526 = vmax.f32 %v518, 0.0
      %v527 = vmax.f32 %v519, 0.0
      %v528 = vmax.f32 %v520, 0.0
      %v529 = vmax.f32 %v521, 0.0
      %v530 = vmax.f32 %v522, 0.0
      %v531 = vld [vmem:[%s7] sm:$0x1]
      %v533 = vlaneseq
      %v534 = vshrl.u32 %v533, 7
      %v535 = vsub.s32 0, %v534
      %v536 = vrot.slane %v531, %v535
      %v538 = vadd.f32 %v472, %v536
      %v539 = vadd.f32 %v476, %v536
      %v540 = vadd.f32 %v482, %v536
      %v541 = vadd.f32 %v486, %v536
      %v542 = vadd.f32 %v492, %v536
      %v543 = vadd.f32 %v496, %v536
      %v544 = vadd.f32 %v502, %v536
      %v545 = vadd.f32 %v506, %v536
      %546 = vst [vmem:[#allocation2] sm:$0xff] 0
      %547 = vst [vmem:[#allocation2 + $0x8] sm:$0xf] 0
      %s548 = scalar_lea.vmem [#allocation2], 108
      %549 = vst [vmem:[%s548] sm:$0xff] 0
      %550 = vst [vmem:[%s548 + $0x8] sm:$0xf] 0
      %v551 = vlaneseq
      %v552 = vshrl.u32 %v551, 7
      %v553 = vrot.slane %v523, 7
      %v554 = vrot.slane %v524, 7
      %v555 = vrot.slane %v525, 7
      %v556 = vrot.slane %v526, 7
      %v557 = vrot.slane %v527, 7
      %v558 = vrot.slane %v528, 7
      %v559 = vrot.slane %v529, 7
      %v560 = vrot.slane %v530, 7
      %vm561 = vcmp.lt.s32.totalorder %v552, 1
      %v562 = vsel %vm561, %v559, %v560
      %v563 = vsel %vm561, %v558, %v559
      %v564 = vsel %vm561, %v557, %v558
      %v565 = vsel %vm561, %v556, %v557
      %v566 = vsel %vm561, %v555, %v556
      %v567 = vsel %vm561, %v554, %v555
      %v568 = vsel %vm561, %v553, %v554
      %v569 = vsel %vm561, %v560, %v553
      %v570 = vrot.slane %v523, 1
      %v571 = vrot.slane %v524, 1
      %v572 = vrot.slane %v525, 1
      %v573 = vrot.slane %v526, 1
      %v574 = vrot.slane %v527, 1
      %v575 = vrot.slane %v528, 1
      %v576 = vrot.slane %v529, 1
      %v577 = vrot.slane %v530, 1
      %vm578 = vcmp.lt.s32.totalorder %v552, 7
      %v579 = vsel %vm578, %v576, %v577
      %v580 = vsel %vm578, %v575, %v576
      %v581 = vsel %vm578, %v574, %v575
      %v582 = vsel %vm578, %v573, %v574
      %v583 = vsel %vm578, %v572, %v573
      %v584 = vsel %vm578, %v571, %v572
      %v585 = vsel %vm578, %v570, %v571
      %v586 = vsel %vm578, %v577, %v570
      %vm587 = vcmp.eq.s32.totalorder %v552, 0
      %v588 = vsel %vm587, 0.0, %v569
      %v589 = vsel %vm587, 0.0, %v568
      %v590 = vsel %vm587, 0.0, %v567
      %v591 = vsel %vm587, 0.0, %v566
      %v592 = vsel %vm587, 0.0, %v565
      %v593 = vsel %vm587, 0.0, %v564
      %v594 = vsel %vm587, 0.0, %v563
      %v595 = vsel %vm587, 0.0, %v562
      %v596 = vpack.c.bf16 %v588, %v588
      %v597 = vpack.c.bf16 %v589, %v589
      %v598 = vpack.c.bf16 %v590, %v590
      %v599 = vpack.c.bf16 %v591, %v591
      %v600 = vpack.c.bf16 %v592, %v592
      %v601 = vpack.c.bf16 %v593, %v593
      %v602 = vpack.c.bf16 %v594, %v594
      %v603 = vpack.c.bf16 %v595, %v595
      %s604 = scalar_lea.vmem [#allocation2], 12
      %605 = vst [vmem:[%s604] sm:$0xf] %v596
      %606 = vst [vmem:[%s604 + $0xc] sm:$0xf] %v597
      %607 = vst [vmem:[%s604 + $0x18] sm:$0xf] %v598
      %608 = vst [vmem:[%s604 + $0x24] sm:$0xf] %v599
      %609 = vst [vmem:[%s604 + $0x30] sm:$0xf] %v600
      %610 = vst [vmem:[%s604 + $0x3c] sm:$0xf] %v601
      %611 = vst [vmem:[%s604 + $0x48] sm:$0xf] %v602
      %612 = vst [vmem:[%s604 + $0x54] sm:$0xf] %v603
      %v613 = vpack.c.bf16 %v523, %v523
      %v614 = vpack.c.bf16 %v524, %v524
      %v615 = vpack.c.bf16 %v525, %v525
      %v616 = vpack.c.bf16 %v526, %v526
      %v617 = vpack.c.bf16 %v527, %v527
      %v618 = vpack.c.bf16 %v528, %v528
      %v619 = vpack.c.bf16 %v529, %v529
      %v620 = vpack.c.bf16 %v530, %v530
      %621 = vst [vmem:[%s604 + $0x4] sm:$0xf] %v613
      %622 = vst [vmem:[%s604 + $0x10] sm:$0xf] %v614
      %623 = vst [vmem:[%s604 + $0x1c] sm:$0xf] %v615
      %624 = vst [vmem:[%s604 + $0x28] sm:$0xf] %v616
      %625 = vst [vmem:[%s604 + $0x34] sm:$0xf] %v617
      %626 = vst [vmem:[%s604 + $0x40] sm:$0xf] %v618
      %627 = vst [vmem:[%s604 + $0x4c] sm:$0xf] %v619
      %628 = vst [vmem:[%s604 + $0x58] sm:$0xf] %v620
      %vm629 = vcmp.eq.s32.totalorder %v552, 7
      %v630 = vsel %vm629, 0.0, %v585
      %v631 = vsel %vm629, 0.0, %v584
      %v632 = vsel %vm629, 0.0, %v583
      %v633 = vsel %vm629, 0.0, %v582
      %v634 = vsel %vm629, 0.0, %v581
      %v635 = vsel %vm629, 0.0, %v580
      %v636 = vsel %vm629, 0.0, %v579
      %v637 = vsel %vm629, 0.0, %v586
      %v638 = vpack.c.bf16 %v630, %v630
      %v639 = vpack.c.bf16 %v631, %v631
      %v640 = vpack.c.bf16 %v632, %v632
      %v641 = vpack.c.bf16 %v633, %v633
      %v642 = vpack.c.bf16 %v634, %v634
      %v643 = vpack.c.bf16 %v635, %v635
      %v644 = vpack.c.bf16 %v636, %v636
      %v645 = vpack.c.bf16 %v637, %v637
      %646 = vst [vmem:[%s604 + $0x8] sm:$0xf] %v638
      %647 = vst [vmem:[%s604 + $0x14] sm:$0xf] %v639
      %648 = vst [vmem:[%s604 + $0x20] sm:$0xf] %v640
      %649 = vst [vmem:[%s604 + $0x2c] sm:$0xf] %v641
      %650 = vst [vmem:[%s604 + $0x38] sm:$0xf] %v642
      %651 = vst [vmem:[%s604 + $0x44] sm:$0xf] %v643
      %652 = vst [vmem:[%s604 + $0x50] sm:$0xf] %v644
      %653 = vst [vmem:[%s604 + $0x5c] sm:$0xf] %v645
      %v654 = vld [vmem:[#allocation2] sm:$0xff]
      %v655 = vld [vmem:[#allocation2 + $0x8] sm:$0xf]
      %v656 = vld [vmem:[#allocation2 + $0xc] sm:$0xff]
      %v657 = vld [vmem:[#allocation2 + $0x14] sm:$0xf]
      %v658 = vld [vmem:[#allocation2 + $0x18] sm:$0xff]
      %v659 = vld [vmem:[#allocation2 + $0x20] sm:$0xf]
      %v660 = vld [vmem:[#allocation2 + $0x24] sm:$0xff]
      %v661 = vld [vmem:[#allocation2 + $0x2c] sm:$0xf]
      %v662 = vld [vmem:[#allocation2 + $0x30] sm:$0xff]
      %v663 = vld [vmem:[#allocation2 + $0x38] sm:$0xf]
      %v664 = vld [vmem:[#allocation2 + $0x3c] sm:$0xff]
      %v665 = vld [vmem:[#allocation2 + $0x44] sm:$0xf]
      %v666 = vld [vmem:[#allocation2 + $0x48] sm:$0xff]
      %v667 = vld [vmem:[#allocation2 + $0x50] sm:$0xf]
      %v668 = vld [vmem:[#allocation2 + $0x54] sm:$0xff]
      %v669 = vld [vmem:[#allocation2 + $0x5c] sm:$0xf]
      %v670 = vld [vmem:[%s3] sm:$0xf]
      %v671 = vld [vmem:[%s3 + $0x4] sm:$0xf]
      %v672 = vld [vmem:[%s3 + $0x8] sm:$0xf]
      %v673 = vld [vmem:[%s3 + $0xc] sm:$0xf]
      %v674 = vld [vmem:[%s3 + $0x10] sm:$0xf]
      %v675 = vld [vmem:[%s3 + $0x14] sm:$0xf]
      %v676 = vld [vmem:[%s3 + $0x18] sm:$0xf]
      %v677 = vld [vmem:[%s3 + $0x1c] sm:$0xf]
      %v678 = vld [vmem:[%s3 + $0x20] sm:$0xf]
      %v679 = vld [vmem:[%s3 + $0x24] sm:$0xf]
      %v680 = vld [vmem:[%s3 + $0x28] sm:$0xf]
      %v681 = vld [vmem:[%s3 + $0x2c] sm:$0xf]
      %v682 = vld [vmem:[%s3 + $0x30] sm:$0xf]
      %v683 = vld [vmem:[%s3 + $0x34] sm:$0xf]
      %v684 = vld [vmem:[%s3 + $0x38] sm:$0xf]
      %v685 = vld [vmem:[%s3 + $0x3c] sm:$0xf]
      %v686 = vld [vmem:[%s3 + $0x40] sm:$0xf]
      %v687 = vld [vmem:[%s3 + $0x44] sm:$0xf]
      %v688 = vld [vmem:[%s3 + $0x48] sm:$0xf]
      %v689 = vld [vmem:[%s3 + $0x4c] sm:$0xf]
      %v690 = vld [vmem:[%s3 + $0x50] sm:$0xf]
      %v691 = vld [vmem:[%s3 + $0x54] sm:$0xf]
      %v692 = vld [vmem:[%s3 + $0x58] sm:$0xf]
      %v693 = vld [vmem:[%s3 + $0x5c] sm:$0xf]
      %v694 = vld [vmem:[%s3 + $0x60] sm:$0xf]
      %v695 = vld [vmem:[%s3 + $0x64] sm:$0xf]
      %v696 = vld [vmem:[%s3 + $0x68] sm:$0xf]
      %v697 = vld [vmem:[%s3 + $0x6c] sm:$0xf]
      %v698 = vld [vmem:[%s3 + $0x70] sm:$0xf]
      %v699 = vld [vmem:[%s3 + $0x74] sm:$0xf]
      %v700 = vld [vmem:[%s3 + $0x78] sm:$0xf]
      %v701 = vld [vmem:[%s3 + $0x7c] sm:$0xf]
      %v702 = vld [vmem:[%s3 + $0x80] sm:$0xf]
      %v703 = vld [vmem:[%s3 + $0x84] sm:$0xf]
      %v704 = vld [vmem:[%s3 + $0x88] sm:$0xf]
      %v705 = vld [vmem:[%s3 + $0x8c] sm:$0xf]
      %v706 = vld [vmem:[%s3 + $0x90] sm:$0xf]
      %v707 = vld [vmem:[%s3 + $0x94] sm:$0xf]
      %v708 = vld [vmem:[%s3 + $0x98] sm:$0xf]
      %v709 = vld [vmem:[%s3 + $0x9c] sm:$0xf]
      %v710 = vld [vmem:[%s3 + $0xa0] sm:$0xf]
      %v711 = vld [vmem:[%s3 + $0xa4] sm:$0xf]
      %v712 = vld [vmem:[%s3 + $0xa8] sm:$0xf]
      %v713 = vld [vmem:[%s3 + $0xac] sm:$0xf]
      %v714 = vld [vmem:[%s3 + $0xb0] sm:$0xf]
      %v715 = vld [vmem:[%s3 + $0xb4] sm:$0xf]
      %v716 = vld [vmem:[%s3 + $0xb8] sm:$0xf]
      %v717 = vld [vmem:[%s3 + $0xbc] sm:$0xf]
      %v718 = vld [vmem:[%s604] sm:$0xff]
      %v719 = vld [vmem:[%s604 + $0x8] sm:$0xf]
      %v720 = vld [vmem:[%s604 + $0xc] sm:$0xff]
      %v721 = vld [vmem:[%s604 + $0x14] sm:$0xf]
      %v722 = vld [vmem:[%s604 + $0x18] sm:$0xff]
      %v723 = vld [vmem:[%s604 + $0x20] sm:$0xf]
      %v724 = vld [vmem:[%s604 + $0x24] sm:$0xff]
      %v725 = vld [vmem:[%s604 + $0x2c] sm:$0xf]
      %v726 = vld [vmem:[%s604 + $0x30] sm:$0xff]
      %v727 = vld [vmem:[%s604 + $0x38] sm:$0xf]
      %v728 = vld [vmem:[%s604 + $0x3c] sm:$0xff]
      %v729 = vld [vmem:[%s604 + $0x44] sm:$0xf]
      %v730 = vld [vmem:[%s604 + $0x48] sm:$0xff]
      %v731 = vld [vmem:[%s604 + $0x50] sm:$0xf]
      %v732 = vld [vmem:[%s604 + $0x54] sm:$0xff]
      %v733 = vld [vmem:[%s604 + $0x5c] sm:$0xf]
      %s734 = scalar_lea.vmem %s3, 192
      %v735 = vld [vmem:[%s734] sm:$0xf]
      %v736 = vld [vmem:[%s734 + $0x4] sm:$0xf]
      %v737 = vld [vmem:[%s734 + $0x8] sm:$0xf]
      %v738 = vld [vmem:[%s734 + $0xc] sm:$0xf]
      %v739 = vld [vmem:[%s734 + $0x10] sm:$0xf]
      %v740 = vld [vmem:[%s734 + $0x14] sm:$0xf]
      %v741 = vld [vmem:[%s734 + $0x18] sm:$0xf]
      %v742 = vld [vmem:[%s734 + $0x1c] sm:$0xf]
      %v743 = vld [vmem:[%s734 + $0x20] sm:$0xf]
      %v744 = vld [vmem:[%s734 + $0x24] sm:$0xf]
      %v745 = vld [vmem:[%s734 + $0x28] sm:$0xf]
      %v746 = vld [vmem:[%s734 + $0x2c] sm:$0xf]
      %v747 = vld [vmem:[%s734 + $0x30] sm:$0xf]
      %v748 = vld [vmem:[%s734 + $0x34] sm:$0xf]
      %v749 = vld [vmem:[%s734 + $0x38] sm:$0xf]
      %v750 = vld [vmem:[%s734 + $0x3c] sm:$0xf]
      %v751 = vld [vmem:[%s734 + $0x40] sm:$0xf]
      %v752 = vld [vmem:[%s734 + $0x44] sm:$0xf]
      %v753 = vld [vmem:[%s734 + $0x48] sm:$0xf]
      %v754 = vld [vmem:[%s734 + $0x4c] sm:$0xf]
      %v755 = vld [vmem:[%s734 + $0x50] sm:$0xf]
      %v756 = vld [vmem:[%s734 + $0x54] sm:$0xf]
      %v757 = vld [vmem:[%s734 + $0x58] sm:$0xf]
      %v758 = vld [vmem:[%s734 + $0x5c] sm:$0xf]
      %v759 = vld [vmem:[%s734 + $0x60] sm:$0xf]
      %v760 = vld [vmem:[%s734 + $0x64] sm:$0xf]
      %v761 = vld [vmem:[%s734 + $0x68] sm:$0xf]
      %v762 = vld [vmem:[%s734 + $0x6c] sm:$0xf]
      %v763 = vld [vmem:[%s734 + $0x70] sm:$0xf]
      %v764 = vld [vmem:[%s734 + $0x74] sm:$0xf]
      %v765 = vld [vmem:[%s734 + $0x78] sm:$0xf]
      %v766 = vld [vmem:[%s734 + $0x7c] sm:$0xf]
      %v767 = vld [vmem:[%s734 + $0x80] sm:$0xf]
      %v768 = vld [vmem:[%s734 + $0x84] sm:$0xf]
      %v769 = vld [vmem:[%s734 + $0x88] sm:$0xf]
      %v770 = vld [vmem:[%s734 + $0x8c] sm:$0xf]
      %v771 = vld [vmem:[%s734 + $0x90] sm:$0xf]
      %v772 = vld [vmem:[%s734 + $0x94] sm:$0xf]
      %v773 = vld [vmem:[%s734 + $0x98] sm:$0xf]
      %v774 = vld [vmem:[%s734 + $0x9c] sm:$0xf]
      %v775 = vld [vmem:[%s734 + $0xa0] sm:$0xf]
      %v776 = vld [vmem:[%s734 + $0xa4] sm:$0xf]
      %v777 = vld [vmem:[%s734 + $0xa8] sm:$0xf]
      %v778 = vld [vmem:[%s734 + $0xac] sm:$0xf]
      %v779 = vld [vmem:[%s734 + $0xb0] sm:$0xf]
      %v780 = vld [vmem:[%s734 + $0xb4] sm:$0xf]
      %v781 = vld [vmem:[%s734 + $0xb8] sm:$0xf]
      %v782 = vld [vmem:[%s734 + $0xbc] sm:$0xf]
      %v799 = vunpack.c.l.b16 %v718
      %v800 = vunpack.c.h.b16 %v718
      %v801 = vunpack.c.l.b16 %v719
      %v802 = vunpack.c.l.b16 %v720
      %v803 = vunpack.c.h.b16 %v720
      %v804 = vunpack.c.l.b16 %v721
      %v805 = vunpack.c.l.b16 %v722
      %v806 = vunpack.c.h.b16 %v722
      %v807 = vunpack.c.l.b16 %v723
      %v808 = vunpack.c.l.b16 %v724
      %v809 = vunpack.c.h.b16 %v724
      %v810 = vunpack.c.l.b16 %v725
      %v811 = vunpack.c.l.b16 %v726
      %v812 = vunpack.c.h.b16 %v726
      %v813 = vunpack.c.l.b16 %v727
      %v814 = vunpack.c.l.b16 %v728
      %v815 = vunpack.c.h.b16 %v728
      %v816 = vunpack.c.l.b16 %v729
      %v817 = vunpack.c.l.b16 %v730
      %v818 = vunpack.c.h.b16 %v730
      %v819 = vunpack.c.l.b16 %v731
      %v820 = vunpack.c.l.b16 %v732
      %v821 = vunpack.c.h.b16 %v732
      %v822 = vunpack.c.l.b16 %v733
      %v823 = vpack.c.b16 %v802, %v799
      %v824 = vpack.c.b16 %v803, %v800
      %v825 = vpack.c.b16 %v804, %v801
      %v826 = vpack.c.b16 %v808, %v805
      %v827 = vpack.c.b16 %v809, %v806
      %v828 = vpack.c.b16 %v810, %v807
      %v829 = vpack.c.b16 %v814, %v811
      %v830 = vpack.c.b16 %v815, %v812
      %v831 = vpack.c.b16 %v816, %v813
      %v832 = vpack.c.b16 %v820, %v817
      %v833 = vpack.c.b16 %v821, %v818
      %v834 = vpack.c.b16 %v822, %v819
      %v895 = vunpack.c.l.b16 %v735
      %v896 = vunpack.c.l.b16 %v736
      %v897 = vunpack.c.l.b16 %v737
      %v898 = vunpack.c.l.b16 %v738
      %v899 = vunpack.c.l.b16 %v739
      %v900 = vunpack.c.l.b16 %v740
      %v901 = vunpack.c.l.b16 %v741
      %v902 = vunpack.c.l.b16 %v742
      %v903 = vunpack.c.l.b16 %v743
      %v904 = vunpack.c.l.b16 %v744
      %v905 = vunpack.c.l.b16 %v745
      %v906 = vunpack.c.l.b16 %v746
      %v907 = vunpack.c.l.b16 %v747
      %v908 = vunpack.c.l.b16 %v748
      %v909 = vunpack.c.l.b16 %v749
      %v910 = vunpack.c.l.b16 %v750
      %v911 = vunpack.c.l.b16 %v751
      %v912 = vunpack.c.l.b16 %v752
      %v913 = vunpack.c.l.b16 %v753
      %v914 = vunpack.c.l.b16 %v754
      %v915 = vunpack.c.l.b16 %v755
      %v916 = vunpack.c.l.b16 %v756
      %v917 = vunpack.c.l.b16 %v757
      %v918 = vunpack.c.l.b16 %v758
      %v919 = vunpack.c.l.b16 %v759
      %v920 = vunpack.c.l.b16 %v760
      %v921 = vunpack.c.l.b16 %v761
      %v922 = vunpack.c.l.b16 %v762
      %v923 = vunpack.c.l.b16 %v763
      %v924 = vunpack.c.l.b16 %v764
      %v925 = vunpack.c.l.b16 %v765
      %v926 = vunpack.c.l.b16 %v766
      %v927 = vunpack.c.l.b16 %v767
      %v928 = vunpack.c.l.b16 %v768
      %v929 = vunpack.c.l.b16 %v769
      %v930 = vunpack.c.l.b16 %v770
      %v931 = vunpack.c.l.b16 %v771
      %v932 = vunpack.c.l.b16 %v772
      %v933 = vunpack.c.l.b16 %v773
      %v934 = vunpack.c.l.b16 %v774
      %v935 = vunpack.c.l.b16 %v775
      %v936 = vunpack.c.l.b16 %v776
      %v937 = vunpack.c.l.b16 %v777
      %v938 = vunpack.c.l.b16 %v778
      %v939 = vunpack.c.l.b16 %v779
      %v940 = vunpack.c.l.b16 %v780
      %v941 = vunpack.c.l.b16 %v781
      %v942 = vunpack.c.l.b16 %v782
      %v943 = vpack.c.b16 %v896, %v895
      %v944 = vpack.c.b16 %v898, %v897
      %v945 = vpack.c.b16 %v900, %v899
      %v946 = vpack.c.b16 %v902, %v901
      %v947 = vpack.c.b16 %v904, %v903
      %v948 = vpack.c.b16 %v906, %v905
      %v949 = vpack.c.b16 %v908, %v907
      %v950 = vpack.c.b16 %v910, %v909
      %v951 = vpack.c.b16 %v912, %v911
      %v952 = vpack.c.b16 %v914, %v913
      %v953 = vpack.c.b16 %v916, %v915
      %v954 = vpack.c.b16 %v918, %v917
      %v955 = vpack.c.b16 %v920, %v919
      %v956 = vpack.c.b16 %v922, %v921
      %v957 = vpack.c.b16 %v924, %v923
      %v958 = vpack.c.b16 %v926, %v925
      %v959 = vpack.c.b16 %v928, %v927
      %v960 = vpack.c.b16 %v930, %v929
      %v961 = vpack.c.b16 %v932, %v931
      %v962 = vpack.c.b16 %v934, %v933
      %v963 = vpack.c.b16 %v936, %v935
      %v964 = vpack.c.b16 %v938, %v937
      %v965 = vpack.c.b16 %v940, %v939
      %v966 = vpack.c.b16 %v942, %v941
      %991 = vmatprep.subr.bf16.mxu0 0
      %992 = vmatpush1.bf16.msra.mxu0 %v950
      %993 = vmatprep.subr.bf16.mxu0 0
      %994 = vmatpush1.bf16.msra.mxu0 %v949
      %995 = vmatprep.subr.bf16.mxu0 0
      %996 = vmatpush1.bf16.msra.mxu0 %v948
      %997 = vmatprep.subr.bf16.mxu0 0
      %998 = vmatpush1.bf16.msra.mxu0 %v947
      %999 = vmatprep.subr.bf16.mxu0 0
      %1000 = vmatpush1.bf16.msra.mxu0 %v946
      %1001 = vmatprep.subr.bf16.mxu0 0
      %1002 = vmatpush1.bf16.msra.mxu0 %v945
      %1003 = vmatprep.subr.bf16.mxu0 0
      %1004 = vmatpush1.bf16.msra.mxu0 %v944
      %1005 = vmatprep.subr.bf16.mxu0 0
      %1006 = vmatpush1.bf16.msra.mxu0 %v943
      %1007 = vmatprep.subr.bf16.mxu0 0
      %1008 = vmatpush2.bf16.msra.mxu0 %v958
      %1009 = vmatprep.subr.bf16.mxu0 0
      %1010 = vmatpush2.bf16.msra.mxu0 %v957
      %1011 = vmatprep.subr.bf16.mxu0 0
      %1012 = vmatpush2.bf16.msra.mxu0 %v956
      %1013 = vmatprep.subr.bf16.mxu0 0
      %1014 = vmatpush2.bf16.msra.mxu0 %v955
      %1015 = vmatprep.subr.bf16.mxu0 0
      %1016 = vmatpush2.bf16.msra.mxu0 %v954
      %1017 = vmatprep.subr.bf16.mxu0 0
      %1018 = vmatpush2.bf16.msra.mxu0 %v953
      %1019 = vmatprep.subr.bf16.mxu0 0
      %1020 = vmatpush2.bf16.msra.mxu0 %v952
      %1021 = vmatprep.subr.bf16.mxu0 0
      %1022 = vmatpush2.bf16.msra.mxu0 %v951
      %1023 = vmatprep.mubr.bf16.mxu0 %v824
      %1024 = vmatmul.mubr.bf16.gmra.mxu0 %v823
      %v1025 = vpop.f32.mrf.mxu0
      %v1026 = vadd.f32 0.0, %v1025
      %v1027 = vpop.f32.mrf.mxu0
      %v1028 = vpop.f32.mrf.mxu0
      %v1029 = vadd.f32 0.0, %v1028
      %v1030 = vpop.f32.mrf.mxu0
      %1031 = vmatprep.mubr.bf16.mxu0 %v827
      %1032 = vmatmul.mubr.bf16.gmra.mxu0 %v826
      %v1033 = vpop.f32.mrf.mxu0
      %v1034 = vadd.f32 0.0, %v1033
      %v1035 = vpop.f32.mrf.mxu0
      %v1036 = vpop.f32.mrf.mxu0
      %v1037 = vadd.f32 0.0, %v1036
      %v1038 = vpop.f32.mrf.mxu0
      %1039 = vmatprep.mubr.bf16.mxu0 %v830
      %1040 = vmatmul.mubr.bf16.gmra.mxu0 %v829
      %v1041 = vpop.f32.mrf.mxu0
      %v1042 = vadd.f32 0.0, %v1041
      %v1043 = vpop.f32.mrf.mxu0
      %v1044 = vpop.f32.mrf.mxu0
      %v1045 = vadd.f32 0.0, %v1044
      %v1046 = vpop.f32.mrf.mxu0
      %1047 = vmatprep.mubr.bf16.mxu0 %v833
      %1048 = vmatmul.mubr.bf16.gmra.mxu0 %v832
      %v1049 = vpop.f32.mrf.mxu0
      %v1050 = vadd.f32 0.0, %v1049
      %v1051 = vpop.f32.mrf.mxu0
      %v1052 = vpop.f32.mrf.mxu0
      %v1053 = vadd.f32 0.0, %v1052
      %v1054 = vpop.f32.mrf.mxu0
      %1055 = vdwg.mxu0
      %1056 = vmatprep.subr.bf16.mxu0 0
      %1057 = vmatpush1.bf16.msra.mxu0 %v966
      %1058 = vmatprep.subr.bf16.mxu0 0
      %1059 = vmatpush1.bf16.msra.mxu0 %v965
      %1060 = vmatprep.subr.bf16.mxu0 0
      %1061 = vmatpush1.bf16.msra.mxu0 %v964
      %1062 = vmatprep.subr.bf16.mxu0 0
      %1063 = vmatpush1.bf16.msra.mxu0 %v963
      %1064 = vmatprep.subr.bf16.mxu0 0
      %1065 = vmatpush1.bf16.msra.mxu0 %v962
      %1066 = vmatprep.subr.bf16.mxu0 0
      %1067 = vmatpush1.bf16.msra.mxu0 %v961
      %1068 = vmatprep.subr.bf16.mxu0 0
      %1069 = vmatpush1.bf16.msra.mxu0 %v960
      %1070 = vmatprep.subr.bf16.mxu0 0
      %1071 = vmatpush1.bf16.msra.mxu0 %v959
      %1072 = vmatprep.subr.bf16.mxu0 0
      %1073 = vmatpush2.bf16.msra.mxu0 0
      %1074 = vmatprep.subr.bf16.mxu0 0
      %1075 = vmatpush2.bf16.msra.mxu0 0
      %1076 = vmatprep.subr.bf16.mxu0 0
      %1077 = vmatpush2.bf16.msra.mxu0 0
      %1078 = vmatprep.subr.bf16.mxu0 0
      %1079 = vmatpush2.bf16.msra.mxu0 0
      %1080 = vmatprep.subr.bf16.mxu0 0
      %1081 = vmatpush2.bf16.msra.mxu0 0
      %1082 = vmatprep.subr.bf16.mxu0 0
      %1083 = vmatpush2.bf16.msra.mxu0 0
      %1084 = vmatprep.subr.bf16.mxu0 0
      %1085 = vmatpush2.bf16.msra.mxu0 0
      %1086 = vmatprep.subr.bf16.mxu0 0
      %1087 = vmatpush2.bf16.msra.mxu0 0
      %1088 = vmatprep.mubr.bf16.mxu0 0
      %1089 = vmatmul.mubr.bf16.gmra.mxu0 %v825
      %v1090 = vpop.f32.mrf.mxu0
      %v1091 = vadd.f32 %v1026, %v1090
      %v1092 = vpop.f32.mrf.mxu0
      %v1093 = vpop.f32.mrf.mxu0
      %v1094 = vadd.f32 %v1029, %v1093
      %v1095 = vpop.f32.mrf.mxu0
      %1096 = vmatprep.mubr.bf16.mxu0 0
      %1097 = vmatmul.mubr.bf16.gmra.mxu0 %v828
      %v1098 = vpop.f32.mrf.mxu0
      %v1099 = vadd.f32 %v1034, %v1098
      %v1100 = vpop.f32.mrf.mxu0
      %v1101 = vpop.f32.mrf.mxu0
      %v1102 = vadd.f32 %v1037, %v1101
      %v1103 = vpop.f32.mrf.mxu0
      %1104 = vmatprep.mubr.bf16.mxu0 0
      %1105 = vmatmul.mubr.bf16.gmra.mxu0 %v831
      %v1106 = vpop.f32.mrf.mxu0
      %v1107 = vadd.f32 %v1042, %v1106
      %v1108 = vpop.f32.mrf.mxu0
      %v1109 = vpop.f32.mrf.mxu0
      %v1110 = vadd.f32 %v1045, %v1109
      %v1111 = vpop.f32.mrf.mxu0
      %1112 = vmatprep.mubr.bf16.mxu0 0
      %1113 = vmatmul.mubr.bf16.gmra.mxu0 %v834
      %v1114 = vpop.f32.mrf.mxu0
      %v1115 = vadd.f32 %v1050, %v1114
      %v1116 = vpop.f32.mrf.mxu0
      %v1117 = vpop.f32.mrf.mxu0
      %v1118 = vadd.f32 %v1053, %v1117
      %v1119 = vpop.f32.mrf.mxu0
      %1120 = vdwg.mxu0
      %v1137 = vunpack.c.l.b16 %v654
      %v1138 = vunpack.c.h.b16 %v654
      %v1139 = vunpack.c.l.b16 %v655
      %v1140 = vunpack.c.l.b16 %v656
      %v1141 = vunpack.c.h.b16 %v656
      %v1142 = vunpack.c.l.b16 %v657
      %v1143 = vunpack.c.l.b16 %v658
      %v1144 = vunpack.c.h.b16 %v658
      %v1145 = vunpack.c.l.b16 %v659
      %v1146 = vunpack.c.l.b16 %v660
      %v1147 = vunpack.c.h.b16 %v660
      %v1148 = vunpack.c.l.b16 %v661
      %v1149 = vunpack.c.l.b16 %v662
      %v1150 = vunpack.c.h.b16 %v662
      %v1151 = vunpack.c.l.b16 %v663
      %v1152 = vunpack.c.l.b16 %v664
      %v1153 = vunpack.c.h.b16 %v664
      %v1154 = vunpack.c.l.b16 %v665
      %v1155 = vunpack.c.l.b16 %v666
      %v1156 = vunpack.c.h.b16 %v666
      %v1157 = vunpack.c.l.b16 %v667
      %v1158 = vunpack.c.l.b16 %v668
      %v1159 = vunpack.c.h.b16 %v668
      %v1160 = vunpack.c.l.b16 %v669
      %v1161 = vpack.c.b16 %v1140, %v1137
      %v1162 = vpack.c.b16 %v1141, %v1138
      %v1163 = vpack.c.b16 %v1142, %v1139
      %v1164 = vpack.c.b16 %v1146, %v1143
      %v1165 = vpack.c.b16 %v1147, %v1144
      %v1166 = vpack.c.b16 %v1148, %v1145
      %v1167 = vpack.c.b16 %v1152, %v1149
      %v1168 = vpack.c.b16 %v1153, %v1150
      %v1169 = vpack.c.b16 %v1154, %v1151
      %v1170 = vpack.c.b16 %v1158, %v1155
      %v1171 = vpack.c.b16 %v1159, %v1156
      %v1172 = vpack.c.b16 %v1160, %v1157
      %v1233 = vunpack.c.l.b16 %v670
      %v1234 = vunpack.c.l.b16 %v671
      %v1235 = vunpack.c.l.b16 %v672
      %v1236 = vunpack.c.l.b16 %v673
      %v1237 = vunpack.c.l.b16 %v674
      %v1238 = vunpack.c.l.b16 %v675
      %v1239 = vunpack.c.l.b16 %v676
      %v1240 = vunpack.c.l.b16 %v677
      %v1241 = vunpack.c.l.b16 %v678
      %v1242 = vunpack.c.l.b16 %v679
      %v1243 = vunpack.c.l.b16 %v680
      %v1244 = vunpack.c.l.b16 %v681
      %v1245 = vunpack.c.l.b16 %v682
      %v1246 = vunpack.c.l.b16 %v683
      %v1247 = vunpack.c.l.b16 %v684
      %v1248 = vunpack.c.l.b16 %v685
      %v1249 = vunpack.c.l.b16 %v686
      %v1250 = vunpack.c.l.b16 %v687
      %v1251 = vunpack.c.l.b16 %v688
      %v1252 = vunpack.c.l.b16 %v689
      %v1253 = vunpack.c.l.b16 %v690
      %v1254 = vunpack.c.l.b16 %v691
      %v1255 = vunpack.c.l.b16 %v692
      %v1256 = vunpack.c.l.b16 %v693
      %v1257 = vunpack.c.l.b16 %v694
      %v1258 = vunpack.c.l.b16 %v695
      %v1259 = vunpack.c.l.b16 %v696
      %v1260 = vunpack.c.l.b16 %v697
      %v1261 = vunpack.c.l.b16 %v698
      %v1262 = vunpack.c.l.b16 %v699
      %v1263 = vunpack.c.l.b16 %v700
      %v1264 = vunpack.c.l.b16 %v701
      %v1265 = vunpack.c.l.b16 %v702
      %v1266 = vunpack.c.l.b16 %v703
      %v1267 = vunpack.c.l.b16 %v704
      %v1268 = vunpack.c.l.b16 %v705
      %v1269 = vunpack.c.l.b16 %v706
      %v1270 = vunpack.c.l.b16 %v707
      %v1271 = vunpack.c.l.b16 %v708
      %v1272 = vunpack.c.l.b16 %v709
      %v1273 = vunpack.c.l.b16 %v710
      %v1274 = vunpack.c.l.b16 %v711
      %v1275 = vunpack.c.l.b16 %v712
      %v1276 = vunpack.c.l.b16 %v713
      %v1277 = vunpack.c.l.b16 %v714
      %v1278 = vunpack.c.l.b16 %v715
      %v1279 = vunpack.c.l.b16 %v716
      %v1280 = vunpack.c.l.b16 %v717
      %v1281 = vpack.c.b16 %v1234, %v1233
      %v1282 = vpack.c.b16 %v1236, %v1235
      %v1283 = vpack.c.b16 %v1238, %v1237
      %v1284 = vpack.c.b16 %v1240, %v1239
      %v1285 = vpack.c.b16 %v1242, %v1241
      %v1286 = vpack.c.b16 %v1244, %v1243
      %v1287 = vpack.c.b16 %v1246, %v1245
      %v1288 = vpack.c.b16 %v1248, %v1247
      %v1289 = vpack.c.b16 %v1250, %v1249
      %v1290 = vpack.c.b16 %v1252, %v1251
      %v1291 = vpack.c.b16 %v1254, %v1253
      %v1292 = vpack.c.b16 %v1256, %v1255
      %v1293 = vpack.c.b16 %v1258, %v1257
      %v1294 = vpack.c.b16 %v1260, %v1259
      %v1295 = vpack.c.b16 %v1262, %v1261
      %v1296 = vpack.c.b16 %v1264, %v1263
      %v1297 = vpack.c.b16 %v1266, %v1265
      %v1298 = vpack.c.b16 %v1268, %v1267
      %v1299 = vpack.c.b16 %v1270, %v1269
      %v1300 = vpack.c.b16 %v1272, %v1271
      %v1301 = vpack.c.b16 %v1274, %v1273
      %v1302 = vpack.c.b16 %v1276, %v1275
      %v1303 = vpack.c.b16 %v1278, %v1277
      %v1304 = vpack.c.b16 %v1280, %v1279
      %1329 = vmatprep.subr.bf16.mxu0 0
      %1330 = vmatpush1.bf16.msra.mxu0 %v1288
      %1331 = vmatprep.subr.bf16.mxu0 0
      %1332 = vmatpush1.bf16.msra.mxu0 %v1287
      %1333 = vmatprep.subr.bf16.mxu0 0
      %1334 = vmatpush1.bf16.msra.mxu0 %v1286
      %1335 = vmatprep.subr.bf16.mxu0 0
      %1336 = vmatpush1.bf16.msra.mxu0 %v1285
      %1337 = vmatprep.subr.bf16.mxu0 0
      %1338 = vmatpush1.bf16.msra.mxu0 %v1284
      %1339 = vmatprep.subr.bf16.mxu0 0
      %1340 = vmatpush1.bf16.msra.mxu0 %v1283
      %1341 = vmatprep.subr.bf16.mxu0 0
      %1342 = vmatpush1.bf16.msra.mxu0 %v1282
      %1343 = vmatprep.subr.bf16.mxu0 0
      %1344 = vmatpush1.bf16.msra.mxu0 %v1281
      %1345 = vmatprep.subr.bf16.mxu0 0
      %1346 = vmatpush2.bf16.msra.mxu0 %v1296
      %1347 = vmatprep.subr.bf16.mxu0 0
      %1348 = vmatpush2.bf16.msra.mxu0 %v1295
      %1349 = vmatprep.subr.bf16.mxu0 0
      %1350 = vmatpush2.bf16.msra.mxu0 %v1294
      %1351 = vmatprep.subr.bf16.mxu0 0
      %1352 = vmatpush2.bf16.msra.mxu0 %v1293
      %1353 = vmatprep.subr.bf16.mxu0 0
      %1354 = vmatpush2.bf16.msra.mxu0 %v1292
      %1355 = vmatprep.subr.bf16.mxu0 0
      %1356 = vmatpush2.bf16.msra.mxu0 %v1291
      %1357 = vmatprep.subr.bf16.mxu0 0
      %1358 = vmatpush2.bf16.msra.mxu0 %v1290
      %1359 = vmatprep.subr.bf16.mxu0 0
      %1360 = vmatpush2.bf16.msra.mxu0 %v1289
      %1361 = vmatprep.mubr.bf16.mxu0 %v1162
      %1362 = vmatmul.mubr.bf16.gmra.mxu0 %v1161
      %v1363 = vpop.f32.mrf.mxu0
      %v1364 = vadd.f32 %v1091, %v1363
      %v1365 = vpop.f32.mrf.mxu0
      %v1366 = vpop.f32.mrf.mxu0
      %v1367 = vadd.f32 %v1094, %v1366
      %v1368 = vpop.f32.mrf.mxu0
      %1369 = vmatprep.mubr.bf16.mxu0 %v1165
      %1370 = vmatmul.mubr.bf16.gmra.mxu0 %v1164
      %v1371 = vpop.f32.mrf.mxu0
      %v1372 = vadd.f32 %v1099, %v1371
      %v1373 = vpop.f32.mrf.mxu0
      %v1374 = vpop.f32.mrf.mxu0
      %v1375 = vadd.f32 %v1102, %v1374
      %v1376 = vpop.f32.mrf.mxu0
      %1377 = vmatprep.mubr.bf16.mxu0 %v1168
      %1378 = vmatmul.mubr.bf16.gmra.mxu0 %v1167
      %v1379 = vpop.f32.mrf.mxu0
      %v1380 = vadd.f32 %v1107, %v1379
      %v1381 = vpop.f32.mrf.mxu0
      %v1382 = vpop.f32.mrf.mxu0
      %v1383 = vadd.f32 %v1110, %v1382
      %v1384 = vpop.f32.mrf.mxu0
      %1385 = vmatprep.mubr.bf16.mxu0 %v1171
      %1386 = vmatmul.mubr.bf16.gmra.mxu0 %v1170
      %v1387 = vpop.f32.mrf.mxu0
      %v1388 = vadd.f32 %v1115, %v1387
      %v1389 = vpop.f32.mrf.mxu0
      %v1390 = vpop.f32.mrf.mxu0
      %v1391 = vadd.f32 %v1118, %v1390
      %v1392 = vpop.f32.mrf.mxu0
      %1393 = vdwg.mxu0
      %1394 = vmatprep.subr.bf16.mxu0 0
      %1395 = vmatpush1.bf16.msra.mxu0 %v1304
      %1396 = vmatprep.subr.bf16.mxu0 0
      %1397 = vmatpush1.bf16.msra.mxu0 %v1303
      %1398 = vmatprep.subr.bf16.mxu0 0
      %1399 = vmatpush1.bf16.msra.mxu0 %v1302
      %1400 = vmatprep.subr.bf16.mxu0 0
      %1401 = vmatpush1.bf16.msra.mxu0 %v1301
      %1402 = vmatprep.subr.bf16.mxu0 0
      %1403 = vmatpush1.bf16.msra.mxu0 %v1300
      %1404 = vmatprep.subr.bf16.mxu0 0
      %1405 = vmatpush1.bf16.msra.mxu0 %v1299
      %1406 = vmatprep.subr.bf16.mxu0 0
      %1407 = vmatpush1.bf16.msra.mxu0 %v1298
      %1408 = vmatprep.subr.bf16.mxu0 0
      %1409 = vmatpush1.bf16.msra.mxu0 %v1297
      %1410 = vmatprep.subr.bf16.mxu0 0
      %1411 = vmatpush2.bf16.msra.mxu0 0
      %1412 = vmatprep.subr.bf16.mxu0 0
      %1413 = vmatpush2.bf16.msra.mxu0 0
      %1414 = vmatprep.subr.bf16.mxu0 0
      %1415 = vmatpush2.bf16.msra.mxu0 0
      %1416 = vmatprep.subr.bf16.mxu0 0
      %1417 = vmatpush2.bf16.msra.mxu0 0
      %1418 = vmatprep.subr.bf16.mxu0 0
      %1419 = vmatpush2.bf16.msra.mxu0 0
      %1420 = vmatprep.subr.bf16.mxu0 0
      %1421 = vmatpush2.bf16.msra.mxu0 0
      %1422 = vmatprep.subr.bf16.mxu0 0
      %1423 = vmatpush2.bf16.msra.mxu0 0
      %1424 = vmatprep.subr.bf16.mxu0 0
      %1425 = vmatpush2.bf16.msra.mxu0 0
      %1426 = vmatprep.mubr.bf16.mxu0 0
      %1427 = vmatmul.mubr.bf16.gmra.mxu0 %v1163
      %v1428 = vpop.f32.mrf.mxu0
      %v1429 = vadd.f32 %v1364, %v1428
      %v1430 = vpop.f32.mrf.mxu0
      %v1431 = vpop.f32.mrf.mxu0
      %v1432 = vadd.f32 %v1367, %v1431
      %v1433 = vpop.f32.mrf.mxu0
      %1434 = vmatprep.mubr.bf16.mxu0 0
      %1435 = vmatmul.mubr.bf16.gmra.mxu0 %v1166
      %v1436 = vpop.f32.mrf.mxu0
      %v1437 = vadd.f32 %v1372, %v1436
      %v1438 = vpop.f32.mrf.mxu0
      %v1439 = vpop.f32.mrf.mxu0
      %v1440 = vadd.f32 %v1375, %v1439
      %v1441 = vpop.f32.mrf.mxu0
      %1442 = vmatprep.mubr.bf16.mxu0 0
      %1443 = vmatmul.mubr.bf16.gmra.mxu0 %v1169
      %v1444 = vpop.f32.mrf.mxu0
      %v1445 = vadd.f32 %v1380, %v1444
      %v1446 = vpop.f32.mrf.mxu0
      %v1447 = vpop.f32.mrf.mxu0
      %v1448 = vadd.f32 %v1383, %v1447
      %v1449 = vpop.f32.mrf.mxu0
      %1450 = vmatprep.mubr.bf16.mxu0 0
      %1451 = vmatmul.mubr.bf16.gmra.mxu0 %v1172
      %v1452 = vpop.f32.mrf.mxu0
      %v1453 = vadd.f32 %v1388, %v1452
      %v1454 = vpop.f32.mrf.mxu0
      %v1455 = vpop.f32.mrf.mxu0
      %v1456 = vadd.f32 %v1391, %v1455
      %v1457 = vpop.f32.mrf.mxu0
      %1458 = vdwg.mxu0
      %s1459 = scalar_lea.vmem [#allocation2], 24
      %v1460 = vld [vmem:[%s1459] sm:$0xff]
      %v1461 = vld [vmem:[%s1459 + $0x8] sm:$0xf]
      %v1462 = vld [vmem:[%s1459 + $0xc] sm:$0xff]
      %v1463 = vld [vmem:[%s1459 + $0x14] sm:$0xf]
      %v1464 = vld [vmem:[%s1459 + $0x18] sm:$0xff]
      %v1465 = vld [vmem:[%s1459 + $0x20] sm:$0xf]
      %v1466 = vld [vmem:[%s1459 + $0x24] sm:$0xff]
      %v1467 = vld [vmem:[%s1459 + $0x2c] sm:$0xf]
      %v1468 = vld [vmem:[%s1459 + $0x30] sm:$0xff]
      %v1469 = vld [vmem:[%s1459 + $0x38] sm:$0xf]
      %v1470 = vld [vmem:[%s1459 + $0x3c] sm:$0xff]
      %v1471 = vld [vmem:[%s1459 + $0x44] sm:$0xf]
      %v1472 = vld [vmem:[%s1459 + $0x48] sm:$0xff]
      %v1473 = vld [vmem:[%s1459 + $0x50] sm:$0xf]
      %v1474 = vld [vmem:[%s1459 + $0x54] sm:$0xff]
      %v1475 = vld [vmem:[%s1459 + $0x5c] sm:$0xf]
      %s1476 = scalar_lea.vmem %s3, 384
      %v1477 = vld [vmem:[%s1476] sm:$0xf]
      %v1478 = vld [vmem:[%s1476 + $0x4] sm:$0xf]
      %v1479 = vld [vmem:[%s1476 + $0x8] sm:$0xf]
      %v1480 = vld [vmem:[%s1476 + $0xc] sm:$0xf]
      %v1481 = vld [vmem:[%s1476 + $0x10] sm:$0xf]
      %v1482 = vld [vmem:[%s1476 + $0x14] sm:$0xf]
      %v1483 = vld [vmem:[%s1476 + $0x18] sm:$0xf]
      %v1484 = vld [vmem:[%s1476 + $0x1c] sm:$0xf]
      %v1485 = vld [vmem:[%s1476 + $0x20] sm:$0xf]
      %v1486 = vld [vmem:[%s1476 + $0x24] sm:$0xf]
      %v1487 = vld [vmem:[%s1476 + $0x28] sm:$0xf]
      %v1488 = vld [vmem:[%s1476 + $0x2c] sm:$0xf]
      %v1489 = vld [vmem:[%s1476 + $0x30] sm:$0xf]
      %v1490 = vld [vmem:[%s1476 + $0x34] sm:$0xf]
      %v1491 = vld [vmem:[%s1476 + $0x38] sm:$0xf]
      %v1492 = vld [vmem:[%s1476 + $0x3c] sm:$0xf]
      %v1493 = vld [vmem:[%s1476 + $0x40] sm:$0xf]
      %v1494 = vld [vmem:[%s1476 + $0x44] sm:$0xf]
      %v1495 = vld [vmem:[%s1476 + $0x48] sm:$0xf]
      %v1496 = vld [vmem:[%s1476 + $0x4c] sm:$0xf]
      %v1497 = vld [vmem:[%s1476 + $0x50] sm:$0xf]
      %v1498 = vld [vmem:[%s1476 + $0x54] sm:$0xf]
      %v1499 = vld [vmem:[%s1476 + $0x58] sm:$0xf]
      %v1500 = vld [vmem:[%s1476 + $0x5c] sm:$0xf]
      %v1501 = vld [vmem:[%s1476 + $0x60] sm:$0xf]
      %v1502 = vld [vmem:[%s1476 + $0x64] sm:$0xf]
      %v1503 = vld [vmem:[%s1476 + $0x68] sm:$0xf]
      %v1504 = vld [vmem:[%s1476 + $0x6c] sm:$0xf]
      %v1505 = vld [vmem:[%s1476 + $0x70] sm:$0xf]
      %v1506 = vld [vmem:[%s1476 + $0x74] sm:$0xf]
      %v1507 = vld [vmem:[%s1476 + $0x78] sm:$0xf]
      %v1508 = vld [vmem:[%s1476 + $0x7c] sm:$0xf]
      %v1509 = vld [vmem:[%s1476 + $0x80] sm:$0xf]
      %v1510 = vld [vmem:[%s1476 + $0x84] sm:$0xf]
      %v1511 = vld [vmem:[%s1476 + $0x88] sm:$0xf]
      %v1512 = vld [vmem:[%s1476 + $0x8c] sm:$0xf]
      %v1513 = vld [vmem:[%s1476 + $0x90] sm:$0xf]
      %v1514 = vld [vmem:[%s1476 + $0x94] sm:$0xf]
      %v1515 = vld [vmem:[%s1476 + $0x98] sm:$0xf]
      %v1516 = vld [vmem:[%s1476 + $0x9c] sm:$0xf]
      %v1517 = vld [vmem:[%s1476 + $0xa0] sm:$0xf]
      %v1518 = vld [vmem:[%s1476 + $0xa4] sm:$0xf]
      %v1519 = vld [vmem:[%s1476 + $0xa8] sm:$0xf]
      %v1520 = vld [vmem:[%s1476 + $0xac] sm:$0xf]
      %v1521 = vld [vmem:[%s1476 + $0xb0] sm:$0xf]
      %v1522 = vld [vmem:[%s1476 + $0xb4] sm:$0xf]
      %v1523 = vld [vmem:[%s1476 + $0xb8] sm:$0xf]
      %v1524 = vld [vmem:[%s1476 + $0xbc] sm:$0xf]
      %v1541 = vunpack.c.l.b16 %v1460
      %v1542 = vunpack.c.h.b16 %v1460
      %v1543 = vunpack.c.l.b16 %v1461
      %v1544 = vunpack.c.l.b16 %v1462
      %v1545 = vunpack.c.h.b16 %v1462
      %v1546 = vunpack.c.l.b16 %v1463
      %v1547 = vunpack.c.l.b16 %v1464
      %v1548 = vunpack.c.h.b16 %v1464
      %v1549 = vunpack.c.l.b16 %v1465
      %v1550 = vunpack.c.l.b16 %v1466
      %v1551 = vunpack.c.h.b16 %v1466
      %v1552 = vunpack.c.l.b16 %v1467
      %v1553 = vunpack.c.l.b16 %v1468
      %v1554 = vunpack.c.h.b16 %v1468
      %v1555 = vunpack.c.l.b16 %v1469
      %v1556 = vunpack.c.l.b16 %v1470
      %v1557 = vunpack.c.h.b16 %v1470
      %v1558 = vunpack.c.l.b16 %v1471
      %v1559 = vunpack.c.l.b16 %v1472
      %v1560 = vunpack.c.h.b16 %v1472
      %v1561 = vunpack.c.l.b16 %v1473
      %v1562 = vunpack.c.l.b16 %v1474
      %v1563 = vunpack.c.h.b16 %v1474
      %v1564 = vunpack.c.l.b16 %v1475
      %v1565 = vpack.c.b16 %v1544, %v1541
      %v1566 = vpack.c.b16 %v1545, %v1542
      %v1567 = vpack.c.b16 %v1546, %v1543
      %v1568 = vpack.c.b16 %v1550, %v1547
      %v1569 = vpack.c.b16 %v1551, %v1548
      %v1570 = vpack.c.b16 %v1552, %v1549
      %v1571 = vpack.c.b16 %v1556, %v1553
      %v1572 = vpack.c.b16 %v1557, %v1554
      %v1573 = vpack.c.b16 %v1558, %v1555
      %v1574 = vpack.c.b16 %v1562, %v1559
      %v1575 = vpack.c.b16 %v1563, %v1560
      %v1576 = vpack.c.b16 %v1564, %v1561
      %v1637 = vunpack.c.l.b16 %v1477
      %v1638 = vunpack.c.l.b16 %v1478
      %v1639 = vunpack.c.l.b16 %v1479
      %v1640 = vunpack.c.l.b16 %v1480
      %v1641 = vunpack.c.l.b16 %v1481
      %v1642 = vunpack.c.l.b16 %v1482
      %v1643 = vunpack.c.l.b16 %v1483
      %v1644 = vunpack.c.l.b16 %v1484
      %v1645 = vunpack.c.l.b16 %v1485
      %v1646 = vunpack.c.l.b16 %v1486
      %v1647 = vunpack.c.l.b16 %v1487
      %v1648 = vunpack.c.l.b16 %v1488
      %v1649 = vunpack.c.l.b16 %v1489
      %v1650 = vunpack.c.l.b16 %v1490
      %v1651 = vunpack.c.l.b16 %v1491
      %v1652 = vunpack.c.l.b16 %v1492
      %v1653 = vunpack.c.l.b16 %v1493
      %v1654 = vunpack.c.l.b16 %v1494
      %v1655 = vunpack.c.l.b16 %v1495
      %v1656 = vunpack.c.l.b16 %v1496
      %v1657 = vunpack.c.l.b16 %v1497
      %v1658 = vunpack.c.l.b16 %v1498
      %v1659 = vunpack.c.l.b16 %v1499
      %v1660 = vunpack.c.l.b16 %v1500
      %v1661 = vunpack.c.l.b16 %v1501
      %v1662 = vunpack.c.l.b16 %v1502
      %v1663 = vunpack.c.l.b16 %v1503
      %v1664 = vunpack.c.l.b16 %v1504
      %v1665 = vunpack.c.l.b16 %v1505
      %v1666 = vunpack.c.l.b16 %v1506
      %v1667 = vunpack.c.l.b16 %v1507
      %v1668 = vunpack.c.l.b16 %v1508
      %v1669 = vunpack.c.l.b16 %v1509
      %v1670 = vunpack.c.l.b16 %v1510
      %v1671 = vunpack.c.l.b16 %v1511
      %v1672 = vunpack.c.l.b16 %v1512
      %v1673 = vunpack.c.l.b16 %v1513
      %v1674 = vunpack.c.l.b16 %v1514
      %v1675 = vunpack.c.l.b16 %v1515
      %v1676 = vunpack.c.l.b16 %v1516
      %v1677 = vunpack.c.l.b16 %v1517
      %v1678 = vunpack.c.l.b16 %v1518
      %v1679 = vunpack.c.l.b16 %v1519
      %v1680 = vunpack.c.l.b16 %v1520
      %v1681 = vunpack.c.l.b16 %v1521
      %v1682 = vunpack.c.l.b16 %v1522
      %v1683 = vunpack.c.l.b16 %v1523
      %v1684 = vunpack.c.l.b16 %v1524
      %v1685 = vpack.c.b16 %v1638, %v1637
      %v1686 = vpack.c.b16 %v1640, %v1639
      %v1687 = vpack.c.b16 %v1642, %v1641
      %v1688 = vpack.c.b16 %v1644, %v1643
      %v1689 = vpack.c.b16 %v1646, %v1645
      %v1690 = vpack.c.b16 %v1648, %v1647
      %v1691 = vpack.c.b16 %v1650, %v1649
      %v1692 = vpack.c.b16 %v1652, %v1651
      %v1693 = vpack.c.b16 %v1654, %v1653
      %v1694 = vpack.c.b16 %v1656, %v1655
      %v1695 = vpack.c.b16 %v1658, %v1657
      %v1696 = vpack.c.b16 %v1660, %v1659
      %v1697 = vpack.c.b16 %v1662, %v1661
      %v1698 = vpack.c.b16 %v1664, %v1663
      %v1699 = vpack.c.b16 %v1666, %v1665
      %v1700 = vpack.c.b16 %v1668, %v1667
      %v1701 = vpack.c.b16 %v1670, %v1669
      %v1702 = vpack.c.b16 %v1672, %v1671
      %v1703 = vpack.c.b16 %v1674, %v1673
      %v1704 = vpack.c.b16 %v1676, %v1675
      %v1705 = vpack.c.b16 %v1678, %v1677
      %v1706 = vpack.c.b16 %v1680, %v1679
      %v1707 = vpack.c.b16 %v1682, %v1681
      %v1708 = vpack.c.b16 %v1684, %v1683
      %1733 = vmatprep.subr.bf16.mxu0 0
      %1734 = vmatpush1.bf16.msra.mxu0 %v1692
      %1735 = vmatprep.subr.bf16.mxu0 0
      %1736 = vmatpush1.bf16.msra.mxu0 %v1691
      %1737 = vmatprep.subr.bf16.mxu0 0
      %1738 = vmatpush1.bf16.msra.mxu0 %v1690
      %1739 = vmatprep.subr.bf16.mxu0 0
      %1740 = vmatpush1.bf16.msra.mxu0 %v1689
      %1741 = vmatprep.subr.bf16.mxu0 0
      %1742 = vmatpush1.bf16.msra.mxu0 %v1688
      %1743 = vmatprep.subr.bf16.mxu0 0
      %1744 = vmatpush1.bf16.msra.mxu0 %v1687
      %1745 = vmatprep.subr.bf16.mxu0 0
      %1746 = vmatpush1.bf16.msra.mxu0 %v1686
      %1747 = vmatprep.subr.bf16.mxu0 0
      %1748 = vmatpush1.bf16.msra.mxu0 %v1685
      %1749 = vmatprep.subr.bf16.mxu0 0
      %1750 = vmatpush2.bf16.msra.mxu0 %v1700
      %1751 = vmatprep.subr.bf16.mxu0 0
      %1752 = vmatpush2.bf16.msra.mxu0 %v1699
      %1753 = vmatprep.subr.bf16.mxu0 0
      %1754 = vmatpush2.bf16.msra.mxu0 %v1698
      %1755 = vmatprep.subr.bf16.mxu0 0
      %1756 = vmatpush2.bf16.msra.mxu0 %v1697
      %1757 = vmatprep.subr.bf16.mxu0 0
      %1758 = vmatpush2.bf16.msra.mxu0 %v1696
      %1759 = vmatprep.subr.bf16.mxu0 0
      %1760 = vmatpush2.bf16.msra.mxu0 %v1695
      %1761 = vmatprep.subr.bf16.mxu0 0
      %1762 = vmatpush2.bf16.msra.mxu0 %v1694
      %1763 = vmatprep.subr.bf16.mxu0 0
      %1764 = vmatpush2.bf16.msra.mxu0 %v1693
      %1765 = vmatprep.mubr.bf16.mxu0 %v1566
      %1766 = vmatmul.mubr.bf16.gmra.mxu0 %v1565
      %v1767 = vpop.f32.mrf.mxu0
      %v1768 = vadd.f32 0.0, %v1767
      %v1769 = vpop.f32.mrf.mxu0
      %v1770 = vpop.f32.mrf.mxu0
      %v1771 = vadd.f32 0.0, %v1770
      %v1772 = vpop.f32.mrf.mxu0
      %1773 = vmatprep.mubr.bf16.mxu0 %v1569
      %1774 = vmatmul.mubr.bf16.gmra.mxu0 %v1568
      %v1775 = vpop.f32.mrf.mxu0
      %v1776 = vadd.f32 0.0, %v1775
      %v1777 = vpop.f32.mrf.mxu0
      %v1778 = vpop.f32.mrf.mxu0
      %v1779 = vadd.f32 0.0, %v1778
      %v1780 = vpop.f32.mrf.mxu0
      %1781 = vmatprep.mubr.bf16.mxu0 %v1572
      %1782 = vmatmul.mubr.bf16.gmra.mxu0 %v1571
      %v1783 = vpop.f32.mrf.mxu0
      %v1784 = vadd.f32 0.0, %v1783
      %v1785 = vpop.f32.mrf.mxu0
      %v1786 = vpop.f32.mrf.mxu0
      %v1787 = vadd.f32 0.0, %v1786
      %v1788 = vpop.f32.mrf.mxu0
      %1789 = vmatprep.mubr.bf16.mxu0 %v1575
      %1790 = vmatmul.mubr.bf16.gmra.mxu0 %v1574
      %v1791 = vpop.f32.mrf.mxu0
      %v1792 = vadd.f32 0.0, %v1791
      %v1793 = vpop.f32.mrf.mxu0
      %v1794 = vpop.f32.mrf.mxu0
      %v1795 = vadd.f32 0.0, %v1794
      %v1796 = vpop.f32.mrf.mxu0
      %1797 = vdwg.mxu0
      %1798 = vmatprep.subr.bf16.mxu0 0
      %1799 = vmatpush1.bf16.msra.mxu0 %v1708
      %1800 = vmatprep.subr.bf16.mxu0 0
      %1801 = vmatpush1.bf16.msra.mxu0 %v1707
      %1802 = vmatprep.subr.bf16.mxu0 0
      %1803 = vmatpush1.bf16.msra.mxu0 %v1706
      %1804 = vmatprep.subr.bf16.mxu0 0
      %1805 = vmatpush1.bf16.msra.mxu0 %v1705
      %1806 = vmatprep.subr.bf16.mxu0 0
      %1807 = vmatpush1.bf16.msra.mxu0 %v1704
      %1808 = vmatprep.subr.bf16.mxu0 0
      %1809 = vmatpush1.bf16.msra.mxu0 %v1703
      %1810 = vmatprep.subr.bf16.mxu0 0
      %1811 = vmatpush1.bf16.msra.mxu0 %v1702
      %1812 = vmatprep.subr.bf16.mxu0 0
      %1813 = vmatpush1.bf16.msra.mxu0 %v1701
      %1814 = vmatprep.subr.bf16.mxu0 0
      %1815 = vmatpush2.bf16.msra.mxu0 0
      %1816 = vmatprep.subr.bf16.mxu0 0
      %1817 = vmatpush2.bf16.msra.mxu0 0
      %1818 = vmatprep.subr.bf16.mxu0 0
      %1819 = vmatpush2.bf16.msra.mxu0 0
      %1820 = vmatprep.subr.bf16.mxu0 0
      %1821 = vmatpush2.bf16.msra.mxu0 0
      %1822 = vmatprep.subr.bf16.mxu0 0
      %1823 = vmatpush2.bf16.msra.mxu0 0
      %1824 = vmatprep.subr.bf16.mxu0 0
      %1825 = vmatpush2.bf16.msra.mxu0 0
      %1826 = vmatprep.subr.bf16.mxu0 0
      %1827 = vmatpush2.bf16.msra.mxu0 0
      %1828 = vmatprep.subr.bf16.mxu0 0
      %1829 = vmatpush2.bf16.msra.mxu0 0
      %1830 = vmatprep.mubr.bf16.mxu0 0
      %1831 = vmatmul.mubr.bf16.gmra.mxu0 %v1567
      %v1832 = vpop.f32.mrf.mxu0
      %v1833 = vadd.f32 %v1768, %v1832
      %v1834 = vpop.f32.mrf.mxu0
      %v1835 = vpop.f32.mrf.mxu0
      %v1836 = vadd.f32 %v1771, %v1835
      %v1837 = vpop.f32.mrf.mxu0
      %1838 = vmatprep.mubr.bf16.mxu0 0
      %1839 = vmatmul.mubr.bf16.gmra.mxu0 %v1570
      %v1840 = vpop.f32.mrf.mxu0
      %v1841 = vadd.f32 %v1776, %v1840
      %v1842 = vpop.f32.mrf.mxu0
      %v1843 = vpop.f32.mrf.mxu0
      %v1844 = vadd.f32 %v1779, %v1843
      %v1845 = vpop.f32.mrf.mxu0
      %1846 = vmatprep.mubr.bf16.mxu0 0
      %1847 = vmatmul.mubr.bf16.gmra.mxu0 %v1573
      %v1848 = vpop.f32.mrf.mxu0
      %v1849 = vadd.f32 %v1784, %v1848
      %v1850 = vpop.f32.mrf.mxu0
      %v1851 = vpop.f32.mrf.mxu0
      %v1852 = vadd.f32 %v1787, %v1851
      %v1853 = vpop.f32.mrf.mxu0
      %1854 = vmatprep.mubr.bf16.mxu0 0
      %1855 = vmatmul.mubr.bf16.gmra.mxu0 %v1576
      %v1856 = vpop.f32.mrf.mxu0
      %v1857 = vadd.f32 %v1792, %v1856
      %v1858 = vpop.f32.mrf.mxu0
      %v1859 = vpop.f32.mrf.mxu0
      %v1860 = vadd.f32 %v1795, %v1859
      %v1861 = vpop.f32.mrf.mxu0
      %1862 = vdwg.mxu0
      %v1863 = vadd.f32 %v1429, %v1833
      %v1864 = vadd.f32 %v1432, %v1836
      %v1865 = vadd.f32 %v1437, %v1841
      %v1866 = vadd.f32 %v1440, %v1844
      %v1867 = vadd.f32 %v1445, %v1849
      %v1868 = vadd.f32 %v1448, %v1852
      %v1869 = vadd.f32 %v1453, %v1857
      %v1870 = vadd.f32 %v1456, %v1860
      %v1871 = vld [vmem:[%s4] sm:$0x1]
      %v1873 = vlaneseq
      %v1874 = vshrl.u32 %v1873, 7
      %v1875 = vsub.s32 0, %v1874
      %v1876 = vrot.slane %v1871, %v1875
      %v1878 = vadd.f32 %v1863, %v1876
      %v1879 = vadd.f32 %v1864, %v1876
      %v1880 = vadd.f32 %v1865, %v1876
      %v1881 = vadd.f32 %v1866, %v1876
      %v1882 = vadd.f32 %v1867, %v1876
      %v1883 = vadd.f32 %v1868, %v1876
      %v1884 = vadd.f32 %v1869, %v1876
      %v1885 = vadd.f32 %v1870, %v1876
      %v1886 = vmax.f32 %v1878, 0.0
      %v1887 = vmax.f32 %v1879, 0.0
      %v1888 = vmax.f32 %v1880, 0.0
      %v1889 = vmax.f32 %v1881, 0.0
      %v1890 = vmax.f32 %v1882, 0.0
      %v1891 = vmax.f32 %v1883, 0.0
      %v1892 = vmax.f32 %v1884, 0.0
      %v1893 = vmax.f32 %v1885, 0.0
      %v1894 = vpack.c.bf16 %v1887, %v1886
      %v1895 = vpack.c.bf16 %v1889, %v1888
      %v1896 = vpack.c.bf16 %v1891, %v1890
      %v1897 = vpack.c.bf16 %v1893, %v1892
      %v1898 = vld [vmem:[%s5] sm:$0xf]
      %v1899 = vld [vmem:[%s5 + $0x4] sm:$0xf]
      %v1900 = vld [vmem:[%s5 + $0x8] sm:$0xf]
      %v1901 = vld [vmem:[%s5 + $0xc] sm:$0xf]
      %v1902 = vld [vmem:[%s5 + $0x10] sm:$0xf]
      %v1903 = vld [vmem:[%s5 + $0x14] sm:$0xf]
      %v1904 = vld [vmem:[%s5 + $0x18] sm:$0xf]
      %v1905 = vld [vmem:[%s5 + $0x1c] sm:$0xf]
      %v1906 = vld [vmem:[%s5 + $0x20] sm:$0xf]
      %v1907 = vld [vmem:[%s5 + $0x24] sm:$0xf]
      %v1908 = vld [vmem:[%s5 + $0x28] sm:$0xf]
      %v1909 = vld [vmem:[%s5 + $0x2c] sm:$0xf]
      %v1910 = vld [vmem:[%s5 + $0x30] sm:$0xf]
      %v1911 = vld [vmem:[%s5 + $0x34] sm:$0xf]
      %v1912 = vld [vmem:[%s5 + $0x38] sm:$0xf]
      %v1913 = vld [vmem:[%s5 + $0x3c] sm:$0xf]
      %v1914 = vld [vmem:[%s6] sm:$0x1]
      %v1916 = vlaneseq
      %v1917 = vshrl.u32 %v1916, 7
      %v1918 = vsub.s32 0, %v1917
      %v1919 = vrot.slane %v1914, %v1918
      %v1937 = vunpack.c.l.b16 %v1898
      %v1938 = vunpack.c.l.b16 %v1899
      %v1939 = vunpack.c.l.b16 %v1900
      %v1940 = vunpack.c.l.b16 %v1901
      %v1941 = vunpack.c.l.b16 %v1902
      %v1942 = vunpack.c.l.b16 %v1903
      %v1943 = vunpack.c.l.b16 %v1904
      %v1944 = vunpack.c.l.b16 %v1905
      %v1945 = vunpack.c.l.b16 %v1906
      %v1946 = vunpack.c.l.b16 %v1907
      %v1947 = vunpack.c.l.b16 %v1908
      %v1948 = vunpack.c.l.b16 %v1909
      %v1949 = vunpack.c.l.b16 %v1910
      %v1950 = vunpack.c.l.b16 %v1911
      %v1951 = vunpack.c.l.b16 %v1912
      %v1952 = vunpack.c.l.b16 %v1913
      %v1953 = vpack.c.b16 %v1938, %v1937
      %v1954 = vpack.c.b16 %v1940, %v1939
      %v1955 = vpack.c.b16 %v1942, %v1941
      %v1956 = vpack.c.b16 %v1944, %v1943
      %v1957 = vpack.c.b16 %v1946, %v1945
      %v1958 = vpack.c.b16 %v1948, %v1947
      %v1959 = vpack.c.b16 %v1950, %v1949
      %v1960 = vpack.c.b16 %v1952, %v1951
      %1969 = vmatprep.subr.bf16.mxu0 0
      %1970 = vmatpush1.bf16.msra.mxu0 %v1960
      %1971 = vmatprep.subr.bf16.mxu0 0
      %1972 = vmatpush1.bf16.msra.mxu0 %v1959
      %1973 = vmatprep.subr.bf16.mxu0 0
      %1974 = vmatpush1.bf16.msra.mxu0 %v1958
      %1975 = vmatprep.subr.bf16.mxu0 0
      %1976 = vmatpush1.bf16.msra.mxu0 %v1957
      %1977 = vmatprep.subr.bf16.mxu0 0
      %1978 = vmatpush1.bf16.msra.mxu0 %v1956
      %1979 = vmatprep.subr.bf16.mxu0 0
      %1980 = vmatpush1.bf16.msra.mxu0 %v1955
      %1981 = vmatprep.subr.bf16.mxu0 0
      %1982 = vmatpush1.bf16.msra.mxu0 %v1954
      %1983 = vmatprep.subr.bf16.mxu0 0
      %1984 = vmatpush1.bf16.msra.mxu0 %v1953
      %1985 = vmatprep.subr.bf16.mxu0 0
      %1986 = vmatpush2.bf16.msra.mxu0 0
      %1987 = vmatprep.subr.bf16.mxu0 0
      %1988 = vmatpush2.bf16.msra.mxu0 0
      %1989 = vmatprep.subr.bf16.mxu0 0
      %1990 = vmatpush2.bf16.msra.mxu0 0
      %1991 = vmatprep.subr.bf16.mxu0 0
      %1992 = vmatpush2.bf16.msra.mxu0 0
      %1993 = vmatprep.subr.bf16.mxu0 0
      %1994 = vmatpush2.bf16.msra.mxu0 0
      %1995 = vmatprep.subr.bf16.mxu0 0
      %1996 = vmatpush2.bf16.msra.mxu0 0
      %1997 = vmatprep.subr.bf16.mxu0 0
      %1998 = vmatpush2.bf16.msra.mxu0 0
      %1999 = vmatprep.subr.bf16.mxu0 0
      %2000 = vmatpush2.bf16.msra.mxu0 0
      %2001 = vmatprep.mubr.bf16.mxu0 0
      %2002 = vmatmul.mubr.bf16.gmra.mxu0 %v1894
      %v2003 = vpop.f32.mrf.mxu0
      %v2004 = vadd.f32 %v1919, %v2003
      %v2005 = vpop.f32.mrf.mxu0
      %v2006 = vpop.f32.mrf.mxu0
      %v2007 = vadd.f32 %v1919, %v2006
      %v2008 = vpop.f32.mrf.mxu0
      %2009 = vmatprep.mubr.bf16.mxu0 0
      %2010 = vmatmul.mubr.bf16.gmra.mxu0 %v1895
      %v2011 = vpop.f32.mrf.mxu0
      %v2012 = vadd.f32 %v1919, %v2011
      %v2013 = vpop.f32.mrf.mxu0
      %v2014 = vpop.f32.mrf.mxu0
      %v2015 = vadd.f32 %v1919, %v2014
      %v2016 = vpop.f32.mrf.mxu0
      %2017 = vmatprep.mubr.bf16.mxu0 0
      %2018 = vmatmul.mubr.bf16.gmra.mxu0 %v1896
      %v2019 = vpop.f32.mrf.mxu0
      %v2020 = vadd.f32 %v1919, %v2019
      %v2021 = vpop.f32.mrf.mxu0
      %v2022 = vpop.f32.mrf.mxu0
      %v2023 = vadd.f32 %v1919, %v2022
      %v2024 = vpop.f32.mrf.mxu0
      %2025 = vmatprep.mubr.bf16.mxu0 0
      %2026 = vmatmul.mubr.bf16.gmra.mxu0 %v1897
      %v2027 = vpop.f32.mrf.mxu0
      %v2028 = vadd.f32 %v1919, %v2027
      %v2029 = vpop.f32.mrf.mxu0
      %v2030 = vpop.f32.mrf.mxu0
      %v2031 = vadd.f32 %v1919, %v2030
      %v2032 = vpop.f32.mrf.mxu0
      %2033 = vdwg.mxu0
      %v2034 = vadd.f32 %v2004, %v538
      %v2035 = vadd.f32 %v2007, %v539
      %v2036 = vadd.f32 %v2012, %v540
      %v2037 = vadd.f32 %v2015, %v541
      %v2038 = vadd.f32 %v2020, %v542
      %v2039 = vadd.f32 %v2023, %v543
      %v2040 = vadd.f32 %v2028, %v544
      %v2041 = vadd.f32 %v2031, %v545
      %v2042 = vmax.f32 %v2034, 0.0
      %v2043 = vmax.f32 %v2035, 0.0
      %v2044 = vmax.f32 %v2036, 0.0
      %v2045 = vmax.f32 %v2037, 0.0
      %v2046 = vmax.f32 %v2038, 0.0
      %v2047 = vmax.f32 %v2039, 0.0
      %v2048 = vmax.f32 %v2040, 0.0
      %v2049 = vmax.f32 %v2041, 0.0
      %2050 = vst [vmem:[%s305] sm:$0xff] %v2042
      %2051 = vst [vmem:[%s305 + $0x8] sm:$0xff] %v2043
      %2052 = vst [vmem:[%s305 + $0x10] sm:$0xff] %v2044
      %2053 = vst [vmem:[%s305 + $0x18] sm:$0xff] %v2045
      %2054 = vst [vmem:[%s305 + $0x20] sm:$0xff] %v2046
      %2055 = vst [vmem:[%s305 + $0x28] sm:$0xff] %v2047
      %2056 = vst [vmem:[%s305 + $0x30] sm:$0xff] %v2048
      %2057 = vst [vmem:[%s305 + $0x38] sm:$0xff] %v2049
      %p2058 = scmp.lt.s32.totalorder %s19, 1
      %s2059 = scalar_select %p2058, %s19, 1
      %s2060 = smul.addr %s2059, 8
      %s2061 = smul.addr %s2060, 8
      %s2062 = scalar_lea.vmem %s8, %s2061
      // Predicated region
      $region53: #{bottleneck_forward.1} parent=51 // pred_check
        %p2063 = pneg %p210
      $region54: #{bottleneck_forward.1} parent=51 // pred_check_branch
        %2065 = sbr.rel (%p2063) target = $region56
      $region55: #{bottleneck_forward.1} parent=51 // pred_region
        _
      $region56: #{bottleneck_forward.1} parent=51 // pred_fallthru
        _
    $region52: #{bottleneck_forward.1} parent=5 // pred_fallthru
      _
    %p2066 = scmp.le.s32.totalorder 2, %s14
    // Predicated region
    $region57: #{bottleneck_forward.1} parent=5 // pred_check
      %p2067 = pneg %p2066
    $region58: #{bottleneck_forward.1} parent=5 // pred_check_branch
      %2069 = sbr.rel (%p2067) target = $region60
    $region59: #{bottleneck_forward.1} parent=5 // pred_region
      %s2070 = ssub.s32 %s14, 2
      // Predicated region
      $region61: #{bottleneck_forward.1} parent=59 // pred_check
        %p2071 = pneg %p216
      $region62: #{bottleneck_forward.1} parent=59 // pred_check_branch
        %2073 = sbr.rel (%p2071) target = $region64
      $region63: #{bottleneck_forward.1} parent=59 // pred_region
        %p2074 = scmp.lt.s32.totalorder %s20, 1
        %s2075 = scalar_select %p2074, %s20, 1
        %s2076 = smul.addr %s2075, 8
        %s2077 = smul.addr %s2076, 8
        %s2078 = scalar_lea.vmem %s8, %s2077
      $region64: #{bottleneck_forward.1} parent=59 // pred_fallthru
        _
    $region60: #{bottleneck_forward.1} parent=5 // pred_fallthru
      _
  $region6: #{bottleneck_forward.1} parent=0 // loop_footer
    %s18 = sadd.s32 1, %s14
  $region7: #{bottleneck_forward.1} parent=0 // loop_footer_branch
    %13 = sbr.rel target = $region3
  $region8: #{bottleneck_forward.1} parent=0 // loop_exit
    _

</llo_original>
